<compile_context>
chip_gen: v7x
topology: tpu7x:2x2x1
jax: 0.10.0
libtpu: 0.0.40
codegen_flags: <defaults>
</compile_context>

<pallas_src>
import jax
import jax.numpy as jnp
from jax import lax
from jax.experimental import pallas as pl
from jax.experimental.pallas import tpu as pltpu


def _make_lstm_predictor_kernel(T, TILE_B, H):
    """Kernel closed over static sizes T (timesteps), TILE_B (padded batch tile), H."""

    def kernel(x_ref, wih_ref, whh_ref, b_ref, wout_ref, bout_ref, out_ref):
        # x_ref:    (T, TILE_B, D)  time-major batch tile (rows padded to 8)
        # wih_ref:  (D, 4H)         input->hidden weights (transposed, gates i,f,g,o)
        # whh_ref:  (H, 4H)         hidden->hidden weights (transposed)
        # b_ref:    (1, 4H)         combined bias (b_ih + b_hh)
        # wout_ref: (H, O)          output linear weights (transposed)
        # bout_ref: (1, O)          output linear bias
        # out_ref:  (TILE_B, O)     sigmoid(Linear(h_T)); padded rows sliced off by wrapper
        whh = whh_ref[...]          # (H, 4H): loaded once, reused every step
        bias = b_ref[...]           # (1, 4H)

        # Hoisted input projection: every x_t @ W_ih is independent of the
        # recurrent state, so these MXU pushes sit off the serial critical
        # path and overlap with the recurrence below.
        x_proj = [
            jnp.dot(x_ref[t], wih_ref[...], preferred_element_type=jnp.float32) + bias
            for t in range(T)
        ]                           # T x (TILE_B, 4H)

        h = jnp.zeros((TILE_B, H), jnp.float32)
        c = jnp.zeros((TILE_B, H), jnp.float32)

        # Fully unrolled recurrence (T static & small): only the dependent
        # (TILE_B,H)@(H,4H) matmul + gate nonlinearities per step.
        # TODO(synk): for large T switch to lax.fori_loop(..., unroll=8) with a
        # pl.ds(pl.multiple_of(...)) slab index to bound vreg live ranges.
        for t in range(T):
            gates = x_proj[t] + jnp.dot(h, whh, preferred_element_type=jnp.float32)
            # Full-width transcendentals: 2 EUP pushes over the whole
            # (TILE_B, 4H) vreg instead of 3 sigmoids + 1 tanh on 32-lane
            # sub-slices; slicing AFTER the EUP lets the XLU lane-rotates
            # co-issue while the EUP is busy instead of serializing the chain.
            sig = jax.nn.sigmoid(gates)
            th = jnp.tanh(gates)
            i_g = sig[:, 0 * H:1 * H]
            f_g = sig[:, 1 * H:2 * H]
            o_g = sig[:, 3 * H:4 * H]
            g_g = th[:, 2 * H:3 * H]
            c = f_g * c + i_g * g_g
            h = o_g * jnp.tanh(c)

        # TODO(synk): nn.Dropout(p=0.5) is treated as eval-mode identity (inference forward).
        y = jnp.dot(h, wout_ref[...], preferred_element_type=jnp.float32) + bout_ref[...]
        out_ref[...] = jax.nn.sigmoid(y)

    return kernel


def predictor_forward(x_btd, w_ih, w_hh, b_ih, b_hh, w_out, b_out):
    """x_btd: (B, T, D_in) like the PyTorch batch_first input. Returns (B, O)."""
    B, T, D = x_btd.shape
    H4 = w_ih.shape[0]
    H = H4 // 4
    O = w_out.shape[0]

    # Batch tile: at least the 8-row f32 sublane tile, at most 256 rows (fills
    # the MXU M dimension on v6e/v7x).  With more than one tile, the grid axis
    # is "parallel" so independent tiles shard across TensorCores (v7x
    # megacore); at the toy shape the grid is just (1,).
    bp8 = ((B + 7) // 8) * 8
    if bp8 <= 256:
        tile_b = bp8
        Bp = bp8
    else:
        tile_b = 256
        Bp = ((B + 255) // 256) * 256

    x_tbd = jnp.transpose(x_btd, (1, 0, 2)).astype(jnp.float32)      # (T, B, D)
    if Bp != B:
        x_tbd = jnp.pad(x_tbd, ((0, 0), (0, Bp - B), (0, 0)))        # (T, Bp, D)

    # Weights pre-transposed so the kernel only does row-major x @ W matmuls.
    wih_t = jnp.transpose(w_ih).astype(jnp.float32)                  # (D, 4H)
    whh_t = jnp.transpose(w_hh).astype(jnp.float32)                  # (H, 4H)
    b = (b_ih + b_hh).reshape(1, 4 * H).astype(jnp.float32)          # (1, 4H)
    wout_t = jnp.transpose(w_out).astype(jnp.float32)                # (H, O)
    bout = b_out.reshape(1, O).astype(jnp.float32)                   # (1, O)

    cost = pl.CostEstimate(
        flops=int(2 * T * Bp * D * 4 * H        # hoisted input projection
                  + 2 * T * Bp * H * 4 * H      # recurrent matmuls
                  + 2 * Bp * H * O),            # output linear
        transcendentals=int(T * Bp * 9 * H + Bp * O),
        bytes_accessed=int(4 * (T * Bp * D + D * 4 * H + H * 4 * H + 4 * H
                                + H * O + O + Bp * O)),
    )

    kernel = _make_lstm_predictor_kernel(T, tile_b, H)
    out_padded = pl.pallas_call(
        kernel,
        out_shape=jax.ShapeDtypeStruct((Bp, O), jnp.float32),
        grid=(Bp // tile_b,),
        in_specs=[
            pl.BlockSpec((T, tile_b, D), lambda i: (0, i, 0)),
            pl.BlockSpec((D, 4 * H), lambda i: (0, 0)),
            pl.BlockSpec((H, 4 * H), lambda i: (0, 0)),
            pl.BlockSpec((1, 4 * H), lambda i: (0, 0)),
            pl.BlockSpec((H, O), lambda i: (0, 0)),
            pl.BlockSpec((1, O), lambda i: (0, 0)),
        ],
        out_specs=pl.BlockSpec((tile_b, O), lambda i: (i, 0)),
        compiler_params=pltpu.CompilerParams(
            dimension_semantics=("parallel",)),
        cost_estimate=cost,
    )(x_tbd, wih_t, whh_t, b, wout_t, bout)
    return out_padded[:B]


def _reference_forward(x_btd, w_ih, w_hh, b_ih, b_hh, w_out, b_out):
    """Pure-JAX reference matching torch.nn.LSTM semantics (for verification)."""
    B, T, D = x_btd.shape
    H = w_hh.shape[1]

    def cell(carry, x_t):
        h, c = carry
        gates = x_t @ w_ih.T + b_ih + h @ w_hh.T + b_hh
        i_g = jax.nn.sigmoid(gates[:, 0 * H:1 * H])
        f_g = jax.nn.sigmoid(gates[:, 1 * H:2 * H])
        g_g = jnp.tanh(gates[:, 2 * H:3 * H])
        o_g = jax.nn.sigmoid(gates[:, 3 * H:4 * H])
        c_new = f_g * c + i_g * g_g
        h_new = o_g * jnp.tanh(c_new)
        return (h_new, c_new), h_new

    h0 = jnp.zeros((B, H), jnp.float32)
    c0 = jnp.zeros((B, H), jnp.float32)
    (h_T, _), _ = lax.scan(cell, (h0, c0), jnp.transpose(x_btd, (1, 0, 2)))
    return jax.nn.sigmoid(h_T @ w_out.T + b_out)


if __name__ == "__main__":
    # Small shapes consistent with the module: Predictor(inputDim=16, hiddenDim=32, outputDim=4)
    B, T, D_IN, H, O = 2, 8, 16, 32, 4

    key = jax.random.PRNGKey(0)
    ks = jax.random.split(key, 7)
    bound = 1.0 / float(jnp.sqrt(jnp.float32(H)))  # PyTorch-style uniform(-1/sqrt(H), 1/sqrt(H))

    x = jax.random.normal(ks[0], (B, T, D_IN), jnp.float32)
    w_ih = jax.random.uniform(ks[1], (4 * H, D_IN), jnp.float32, -bound, bound)
    w_hh = jax.random.uniform(ks[2], (4 * H, H), jnp.float32, -bound, bound)
    b_ih = jax.random.uniform(ks[3], (4 * H,), jnp.float32, -bound, bound)
    b_hh = jax.random.uniform(ks[4], (4 * H,), jnp.float32, -bound, bound)
    w_out = jax.random.uniform(ks[5], (O, H), jnp.float32, -bound, bound)
    b_out = jax.random.uniform(ks[6], (O,), jnp.float32, -bound, bound)

    out = predictor_forward(x, w_ih, w_hh, b_ih, b_hh, w_out, b_out)
    out = jax.block_until_ready(out)

    ref = _reference_forward(x, w_ih, w_hh, b_ih, b_hh, w_out, b_out)
    assert out.shape == (B, O)
    assert jnp.allclose(out, ref, atol=1e-5, rtol=1e-4), "mismatch vs JAX reference"

    print("KERNEL_OK")
</pallas_src>

<mosaic_0001>
module attributes {stable_mosaic.version = 11 : i64} {
  func.func @kernel(%arg0: i32, %arg1: memref<8x8x16xf32, #tpu.memory_space<vmem>>, %arg2: memref<16x128xf32, #tpu.memory_space<vmem>>, %arg3: memref<32x128xf32, #tpu.memory_space<vmem>>, %arg4: memref<1x128xf32, #tpu.memory_space<vmem>>, %arg5: memref<32x4xf32, #tpu.memory_space<vmem>>, %arg6: memref<1x4xf32, #tpu.memory_space<vmem>>, %arg7: memref<8x4xf32, #tpu.memory_space<vmem>>) attributes {dimension_semantics = [#tpu.dimension_semantics<parallel>], iteration_bounds = array<i64: 1>, scalar_prefetch = 0 : i64, scratch_operands = 0 : i64, tpu.core_type = #tpu.core_type<tc>, window_params = [{transform_indices = @transform_0, window_bounds = array<i64: 8, 8, 16>}, {pipeline_mode = #tpu.pipeline_mode<synchronous>, transform_indices = @transform_1, window_bounds = array<i64: 16, 128>}, {pipeline_mode = #tpu.pipeline_mode<synchronous>, transform_indices = @transform_2, window_bounds = array<i64: 32, 128>}, {pipeline_mode = #tpu.pipeline_mode<synchronous>, transform_indices = @transform_3, window_bounds = array<i64: 1, 128>}, {pipeline_mode = #tpu.pipeline_mode<synchronous>, transform_indices = @transform_4, window_bounds = array<i64: 32, 4>}, {pipeline_mode = #tpu.pipeline_mode<synchronous>, transform_indices = @transform_5, window_bounds = array<i64: 1, 4>}, {transform_indices = @transform_6, window_bounds = array<i64: 8, 4>}]} {
    %c0 = arith.constant 0 : index
    %c0_0 = arith.constant 0 : index
    %0 = vector.load %arg3[%c0, %c0_0] : memref<32x128xf32, #tpu.memory_space<vmem>>, vector<32x128xf32>
    %c0_1 = arith.constant 0 : index
    %c0_2 = arith.constant 0 : index
    %1 = vector.load %arg4[%c0_1, %c0_2] : memref<1x128xf32, #tpu.memory_space<vmem>>, vector<1x128xf32>
    %c0_3 = arith.constant 0 : index
    %c0_4 = arith.constant 0 : index
    %c0_5 = arith.constant 0 : index
    %2 = vector.load %arg1[%c0_3, %c0_4, %c0_5] : memref<8x8x16xf32, #tpu.memory_space<vmem>>, vector<1x8x16xf32>
    %3 = vector.shape_cast %2 : vector<1x8x16xf32> to vector<8x16xf32>
    %c0_6 = arith.constant 0 : index
    %c0_7 = arith.constant 0 : index
    %4 = vector.load %arg2[%c0_6, %c0_7] : memref<16x128xf32, #tpu.memory_space<vmem>>, vector<16x128xf32>
    %cst = arith.constant dense<0.000000e+00> : vector<8x128xf32>
    %5 = tpu.matmul %3, %4, %cst {dimension_numbers = #tpu.dot_dimension_numbers<[1], [0], [0], [1], [0, 0, 1, 1], [], []>} : vector<8x16xf32>, vector<16x128xf32>, vector<8x128xf32> -> vector<8x128xf32>
    %6 = vector.broadcast %1 : vector<1x128xf32> to vector<8x128xf32>
    %7 = arith.addf %5, %6 : vector<8x128xf32>
    %c1 = arith.constant 1 : index
    %c0_8 = arith.constant 0 : index
    %c0_9 = arith.constant 0 : index
    %8 = vector.load %arg1[%c1, %c0_8, %c0_9] : memref<8x8x16xf32, #tpu.memory_space<vmem>>, vector<1x8x16xf32>
    %9 = vector.shape_cast %8 : vector<1x8x16xf32> to vector<8x16xf32>
    %c0_10 = arith.constant 0 : index
    %c0_11 = arith.constant 0 : index
    %10 = vector.load %arg2[%c0_10, %c0_11] : memref<16x128xf32, #tpu.memory_space<vmem>>, vector<16x128xf32>
    %cst_12 = arith.constant dense<0.000000e+00> : vector<8x128xf32>
    %11 = tpu.matmul %9, %10, %cst_12 {dimension_numbers = #tpu.dot_dimension_numbers<[1], [0], [0], [1], [0, 0, 1, 1], [], []>} : vector<8x16xf32>, vector<16x128xf32>, vector<8x128xf32> -> vector<8x128xf32>
    %12 = vector.broadcast %1 : vector<1x128xf32> to vector<8x128xf32>
    %13 = arith.addf %11, %12 : vector<8x128xf32>
    %c2 = arith.constant 2 : index
    %c0_13 = arith.constant 0 : index
    %c0_14 = arith.constant 0 : index
    %14 = vector.load %arg1[%c2, %c0_13, %c0_14] : memref<8x8x16xf32, #tpu.memory_space<vmem>>, vector<1x8x16xf32>
    %15 = vector.shape_cast %14 : vector<1x8x16xf32> to vector<8x16xf32>
    %c0_15 = arith.constant 0 : index
    %c0_16 = arith.constant 0 : index
    %16 = vector.load %arg2[%c0_15, %c0_16] : memref<16x128xf32, #tpu.memory_space<vmem>>, vector<16x128xf32>
    %cst_17 = arith.constant dense<0.000000e+00> : vector<8x128xf32>
    %17 = tpu.matmul %15, %16, %cst_17 {dimension_numbers = #tpu.dot_dimension_numbers<[1], [0], [0], [1], [0, 0, 1, 1], [], []>} : vector<8x16xf32>, vector<16x128xf32>, vector<8x128xf32> -> vector<8x128xf32>
    %18 = vector.broadcast %1 : vector<1x128xf32> to vector<8x128xf32>
    %19 = arith.addf %17, %18 : vector<8x128xf32>
    %c3 = arith.constant 3 : index
    %c0_18 = arith.constant 0 : index
    %c0_19 = arith.constant 0 : index
    %20 = vector.load %arg1[%c3, %c0_18, %c0_19] : memref<8x8x16xf32, #tpu.memory_space<vmem>>, vector<1x8x16xf32>
    %21 = vector.shape_cast %20 : vector<1x8x16xf32> to vector<8x16xf32>
    %c0_20 = arith.constant 0 : index
    %c0_21 = arith.constant 0 : index
    %22 = vector.load %arg2[%c0_20, %c0_21] : memref<16x128xf32, #tpu.memory_space<vmem>>, vector<16x128xf32>
    %cst_22 = arith.constant dense<0.000000e+00> : vector<8x128xf32>
    %23 = tpu.matmul %21, %22, %cst_22 {dimension_numbers = #tpu.dot_dimension_numbers<[1], [0], [0], [1], [0, 0, 1, 1], [], []>} : vector<8x16xf32>, vector<16x128xf32>, vector<8x128xf32> -> vector<8x128xf32>
    %24 = vector.broadcast %1 : vector<1x128xf32> to vector<8x128xf32>
    %25 = arith.addf %23, %24 : vector<8x128xf32>
    %c4 = arith.constant 4 : index
    %c0_23 = arith.constant 0 : index
    %c0_24 = arith.constant 0 : index
    %26 = vector.load %arg1[%c4, %c0_23, %c0_24] : memref<8x8x16xf32, #tpu.memory_space<vmem>>, vector<1x8x16xf32>
    %27 = vector.shape_cast %26 : vector<1x8x16xf32> to vector<8x16xf32>
    %c0_25 = arith.constant 0 : index
    %c0_26 = arith.constant 0 : index
    %28 = vector.load %arg2[%c0_25, %c0_26] : memref<16x128xf32, #tpu.memory_space<vmem>>, vector<16x128xf32>
    %cst_27 = arith.constant dense<0.000000e+00> : vector<8x128xf32>
    %29 = tpu.matmul %27, %28, %cst_27 {dimension_numbers = #tpu.dot_dimension_numbers<[1], [0], [0], [1], [0, 0, 1, 1], [], []>} : vector<8x16xf32>, vector<16x128xf32>, vector<8x128xf32> -> vector<8x128xf32>
    %30 = vector.broadcast %1 : vector<1x128xf32> to vector<8x128xf32>
    %31 = arith.addf %29, %30 : vector<8x128xf32>
    %c5 = arith.constant 5 : index
    %c0_28 = arith.constant 0 : index
    %c0_29 = arith.constant 0 : index
    %32 = vector.load %arg1[%c5, %c0_28, %c0_29] : memref<8x8x16xf32, #tpu.memory_space<vmem>>, vector<1x8x16xf32>
    %33 = vector.shape_cast %32 : vector<1x8x16xf32> to vector<8x16xf32>
    %c0_30 = arith.constant 0 : index
    %c0_31 = arith.constant 0 : index
    %34 = vector.load %arg2[%c0_30, %c0_31] : memref<16x128xf32, #tpu.memory_space<vmem>>, vector<16x128xf32>
    %cst_32 = arith.constant dense<0.000000e+00> : vector<8x128xf32>
    %35 = tpu.matmul %33, %34, %cst_32 {dimension_numbers = #tpu.dot_dimension_numbers<[1], [0], [0], [1], [0, 0, 1, 1], [], []>} : vector<8x16xf32>, vector<16x128xf32>, vector<8x128xf32> -> vector<8x128xf32>
    %36 = vector.broadcast %1 : vector<1x128xf32> to vector<8x128xf32>
    %37 = arith.addf %35, %36 : vector<8x128xf32>
    %c6 = arith.constant 6 : index
    %c0_33 = arith.constant 0 : index
    %c0_34 = arith.constant 0 : index
    %38 = vector.load %arg1[%c6, %c0_33, %c0_34] : memref<8x8x16xf32, #tpu.memory_space<vmem>>, vector<1x8x16xf32>
    %39 = vector.shape_cast %38 : vector<1x8x16xf32> to vector<8x16xf32>
    %c0_35 = arith.constant 0 : index
    %c0_36 = arith.constant 0 : index
    %40 = vector.load %arg2[%c0_35, %c0_36] : memref<16x128xf32, #tpu.memory_space<vmem>>, vector<16x128xf32>
    %cst_37 = arith.constant dense<0.000000e+00> : vector<8x128xf32>
    %41 = tpu.matmul %39, %40, %cst_37 {dimension_numbers = #tpu.dot_dimension_numbers<[1], [0], [0], [1], [0, 0, 1, 1], [], []>} : vector<8x16xf32>, vector<16x128xf32>, vector<8x128xf32> -> vector<8x128xf32>
    %42 = vector.broadcast %1 : vector<1x128xf32> to vector<8x128xf32>
    %43 = arith.addf %41, %42 : vector<8x128xf32>
    %c7 = arith.constant 7 : index
    %c0_38 = arith.constant 0 : index
    %c0_39 = arith.constant 0 : index
    %44 = vector.load %arg1[%c7, %c0_38, %c0_39] : memref<8x8x16xf32, #tpu.memory_space<vmem>>, vector<1x8x16xf32>
    %45 = vector.shape_cast %44 : vector<1x8x16xf32> to vector<8x16xf32>
    %c0_40 = arith.constant 0 : index
    %c0_41 = arith.constant 0 : index
    %46 = vector.load %arg2[%c0_40, %c0_41] : memref<16x128xf32, #tpu.memory_space<vmem>>, vector<16x128xf32>
    %cst_42 = arith.constant dense<0.000000e+00> : vector<8x128xf32>
    %47 = tpu.matmul %45, %46, %cst_42 {dimension_numbers = #tpu.dot_dimension_numbers<[1], [0], [0], [1], [0, 0, 1, 1], [], []>} : vector<8x16xf32>, vector<16x128xf32>, vector<8x128xf32> -> vector<8x128xf32>
    %48 = vector.broadcast %1 : vector<1x128xf32> to vector<8x128xf32>
    %49 = arith.addf %47, %48 : vector<8x128xf32>
    %cst_43 = arith.constant 0.000000e+00 : f32
    %50 = vector.broadcast %cst_43 : f32 to vector<8x32xf32>
    %cst_44 = arith.constant 0.000000e+00 : f32
    %51 = vector.broadcast %cst_44 : f32 to vector<8x32xf32>
    %cst_45 = arith.constant dense<0.000000e+00> : vector<8x128xf32>
    %52 = tpu.matmul %50, %0, %cst_45 {dimension_numbers = #tpu.dot_dimension_numbers<[1], [0], [0], [1], [0, 0, 1, 1], [], []>} : vector<8x32xf32>, vector<32x128xf32>, vector<8x128xf32> -> vector<8x128xf32>
    %53 = arith.addf %7, %52 : vector<8x128xf32>
    %54 = arith.negf %53 : vector<8x128xf32>
    %55 = math.exp %54 : vector<8x128xf32>
    %cst_46 = arith.constant 1.000000e+00 : f32
    %56 = vector.broadcast %cst_46 : f32 to vector<8x128xf32>
    %57 = arith.addf %56, %55 : vector<8x128xf32>
    %58 = arith.divf %56, %57 : vector<8x128xf32>
    %59 = math.tanh %53 : vector<8x128xf32>
    %60 = vector.extract_strided_slice %58 {offsets = [0, 0], sizes = [8, 32], strides = [1, 1]} : vector<8x128xf32> to vector<8x32xf32>
    %61 = vector.extract_strided_slice %58 {offsets = [0, 32], sizes = [8, 32], strides = [1, 1]} : vector<8x128xf32> to vector<8x32xf32>
    %62 = vector.extract_strided_slice %58 {offsets = [0, 96], sizes = [8, 32], strides = [1, 1]} : vector<8x128xf32> to vector<8x32xf32>
    %63 = vector.extract_strided_slice %59 {offsets = [0, 64], sizes = [8, 32], strides = [1, 1]} : vector<8x128xf32> to vector<8x32xf32>
    %64 = arith.mulf %61, %51 : vector<8x32xf32>
    %65 = arith.mulf %60, %63 : vector<8x32xf32>
    %66 = arith.addf %64, %65 : vector<8x32xf32>
    %67 = math.tanh %66 : vector<8x32xf32>
    %68 = arith.mulf %62, %67 : vector<8x32xf32>
    %cst_47 = arith.constant dense<0.000000e+00> : vector<8x128xf32>
    %69 = tpu.matmul %68, %0, %cst_47 {dimension_numbers = #tpu.dot_dimension_numbers<[1], [0], [0], [1], [0, 0, 1, 1], [], []>} : vector<8x32xf32>, vector<32x128xf32>, vector<8x128xf32> -> vector<8x128xf32>
    %70 = arith.addf %13, %69 : vector<8x128xf32>
    %71 = arith.negf %70 : vector<8x128xf32>
    %72 = math.exp %71 : vector<8x128xf32>
    %cst_48 = arith.constant 1.000000e+00 : f32
    %73 = vector.broadcast %cst_48 : f32 to vector<8x128xf32>
    %74 = arith.addf %73, %72 : vector<8x128xf32>
    %75 = arith.divf %73, %74 : vector<8x128xf32>
    %76 = math.tanh %70 : vector<8x128xf32>
    %77 = vector.extract_strided_slice %75 {offsets = [0, 0], sizes = [8, 32], strides = [1, 1]} : vector<8x128xf32> to vector<8x32xf32>
    %78 = vector.extract_strided_slice %75 {offsets = [0, 32], sizes = [8, 32], strides = [1, 1]} : vector<8x128xf32> to vector<8x32xf32>
    %79 = vector.extract_strided_slice %75 {offsets = [0, 96], sizes = [8, 32], strides = [1, 1]} : vector<8x128xf32> to vector<8x32xf32>
    %80 = vector.extract_strided_slice %76 {offsets = [0, 64], sizes = [8, 32], strides = [1, 1]} : vector<8x128xf32> to vector<8x32xf32>
    %81 = arith.mulf %78, %66 : vector<8x32xf32>
    %82 = arith.mulf %77, %80 : vector<8x32xf32>
    %83 = arith.addf %81, %82 : vector<8x32xf32>
    %84 = math.tanh %83 : vector<8x32xf32>
    %85 = arith.mulf %79, %84 : vector<8x32xf32>
    %cst_49 = arith.constant dense<0.000000e+00> : vector<8x128xf32>
    %86 = tpu.matmul %85, %0, %cst_49 {dimension_numbers = #tpu.dot_dimension_numbers<[1], [0], [0], [1], [0, 0, 1, 1], [], []>} : vector<8x32xf32>, vector<32x128xf32>, vector<8x128xf32> -> vector<8x128xf32>
    %87 = arith.addf %19, %86 : vector<8x128xf32>
    %88 = arith.negf %87 : vector<8x128xf32>
    %89 = math.exp %88 : vector<8x128xf32>
    %cst_50 = arith.constant 1.000000e+00 : f32
    %90 = vector.broadcast %cst_50 : f32 to vector<8x128xf32>
    %91 = arith.addf %90, %89 : vector<8x128xf32>
    %92 = arith.divf %90, %91 : vector<8x128xf32>
    %93 = math.tanh %87 : vector<8x128xf32>
    %94 = vector.extract_strided_slice %92 {offsets = [0, 0], sizes = [8, 32], strides = [1, 1]} : vector<8x128xf32> to vector<8x32xf32>
    %95 = vector.extract_strided_slice %92 {offsets = [0, 32], sizes = [8, 32], strides = [1, 1]} : vector<8x128xf32> to vector<8x32xf32>
    %96 = vector.extract_strided_slice %92 {offsets = [0, 96], sizes = [8, 32], strides = [1, 1]} : vector<8x128xf32> to vector<8x32xf32>
    %97 = vector.extract_strided_slice %93 {offsets = [0, 64], sizes = [8, 32], strides = [1, 1]} : vector<8x128xf32> to vector<8x32xf32>
    %98 = arith.mulf %95, %83 : vector<8x32xf32>
    %99 = arith.mulf %94, %97 : vector<8x32xf32>
    %100 = arith.addf %98, %99 : vector<8x32xf32>
    %101 = math.tanh %100 : vector<8x32xf32>
    %102 = arith.mulf %96, %101 : vector<8x32xf32>
    %cst_51 = arith.constant dense<0.000000e+00> : vector<8x128xf32>
    %103 = tpu.matmul %102, %0, %cst_51 {dimension_numbers = #tpu.dot_dimension_numbers<[1], [0], [0], [1], [0, 0, 1, 1], [], []>} : vector<8x32xf32>, vector<32x128xf32>, vector<8x128xf32> -> vector<8x128xf32>
    %104 = arith.addf %25, %103 : vector<8x128xf32>
    %105 = arith.negf %104 : vector<8x128xf32>
    %106 = math.exp %105 : vector<8x128xf32>
    %cst_52 = arith.constant 1.000000e+00 : f32
    %107 = vector.broadcast %cst_52 : f32 to vector<8x128xf32>
    %108 = arith.addf %107, %106 : vector<8x128xf32>
    %109 = arith.divf %107, %108 : vector<8x128xf32>
    %110 = math.tanh %104 : vector<8x128xf32>
    %111 = vector.extract_strided_slice %109 {offsets = [0, 0], sizes = [8, 32], strides = [1, 1]} : vector<8x128xf32> to vector<8x32xf32>
    %112 = vector.extract_strided_slice %109 {offsets = [0, 32], sizes = [8, 32], strides = [1, 1]} : vector<8x128xf32> to vector<8x32xf32>
    %113 = vector.extract_strided_slice %109 {offsets = [0, 96], sizes = [8, 32], strides = [1, 1]} : vector<8x128xf32> to vector<8x32xf32>
    %114 = vector.extract_strided_slice %110 {offsets = [0, 64], sizes = [8, 32], strides = [1, 1]} : vector<8x128xf32> to vector<8x32xf32>
    %115 = arith.mulf %112, %100 : vector<8x32xf32>
    %116 = arith.mulf %111, %114 : vector<8x32xf32>
    %117 = arith.addf %115, %116 : vector<8x32xf32>
    %118 = math.tanh %117 : vector<8x32xf32>
    %119 = arith.mulf %113, %118 : vector<8x32xf32>
    %cst_53 = arith.constant dense<0.000000e+00> : vector<8x128xf32>
    %120 = tpu.matmul %119, %0, %cst_53 {dimension_numbers = #tpu.dot_dimension_numbers<[1], [0], [0], [1], [0, 0, 1, 1], [], []>} : vector<8x32xf32>, vector<32x128xf32>, vector<8x128xf32> -> vector<8x128xf32>
    %121 = arith.addf %31, %120 : vector<8x128xf32>
    %122 = arith.negf %121 : vector<8x128xf32>
    %123 = math.exp %122 : vector<8x128xf32>
    %cst_54 = arith.constant 1.000000e+00 : f32
    %124 = vector.broadcast %cst_54 : f32 to vector<8x128xf32>
    %125 = arith.addf %124, %123 : vector<8x128xf32>
    %126 = arith.divf %124, %125 : vector<8x128xf32>
    %127 = math.tanh %121 : vector<8x128xf32>
    %128 = vector.extract_strided_slice %126 {offsets = [0, 0], sizes = [8, 32], strides = [1, 1]} : vector<8x128xf32> to vector<8x32xf32>
    %129 = vector.extract_strided_slice %126 {offsets = [0, 32], sizes = [8, 32], strides = [1, 1]} : vector<8x128xf32> to vector<8x32xf32>
    %130 = vector.extract_strided_slice %126 {offsets = [0, 96], sizes = [8, 32], strides = [1, 1]} : vector<8x128xf32> to vector<8x32xf32>
    %131 = vector.extract_strided_slice %127 {offsets = [0, 64], sizes = [8, 32], strides = [1, 1]} : vector<8x128xf32> to vector<8x32xf32>
    %132 = arith.mulf %129, %117 : vector<8x32xf32>
    %133 = arith.mulf %128, %131 : vector<8x32xf32>
    %134 = arith.addf %132, %133 : vector<8x32xf32>
    %135 = math.tanh %134 : vector<8x32xf32>
    %136 = arith.mulf %130, %135 : vector<8x32xf32>
    %cst_55 = arith.constant dense<0.000000e+00> : vector<8x128xf32>
    %137 = tpu.matmul %136, %0, %cst_55 {dimension_numbers = #tpu.dot_dimension_numbers<[1], [0], [0], [1], [0, 0, 1, 1], [], []>} : vector<8x32xf32>, vector<32x128xf32>, vector<8x128xf32> -> vector<8x128xf32>
    %138 = arith.addf %37, %137 : vector<8x128xf32>
    %139 = arith.negf %138 : vector<8x128xf32>
    %140 = math.exp %139 : vector<8x128xf32>
    %cst_56 = arith.constant 1.000000e+00 : f32
    %141 = vector.broadcast %cst_56 : f32 to vector<8x128xf32>
    %142 = arith.addf %141, %140 : vector<8x128xf32>
    %143 = arith.divf %141, %142 : vector<8x128xf32>
    %144 = math.tanh %138 : vector<8x128xf32>
    %145 = vector.extract_strided_slice %143 {offsets = [0, 0], sizes = [8, 32], strides = [1, 1]} : vector<8x128xf32> to vector<8x32xf32>
    %146 = vector.extract_strided_slice %143 {offsets = [0, 32], sizes = [8, 32], strides = [1, 1]} : vector<8x128xf32> to vector<8x32xf32>
    %147 = vector.extract_strided_slice %143 {offsets = [0, 96], sizes = [8, 32], strides = [1, 1]} : vector<8x128xf32> to vector<8x32xf32>
    %148 = vector.extract_strided_slice %144 {offsets = [0, 64], sizes = [8, 32], strides = [1, 1]} : vector<8x128xf32> to vector<8x32xf32>
    %149 = arith.mulf %146, %134 : vector<8x32xf32>
    %150 = arith.mulf %145, %148 : vector<8x32xf32>
    %151 = arith.addf %149, %150 : vector<8x32xf32>
    %152 = math.tanh %151 : vector<8x32xf32>
    %153 = arith.mulf %147, %152 : vector<8x32xf32>
    %cst_57 = arith.constant dense<0.000000e+00> : vector<8x128xf32>
    %154 = tpu.matmul %153, %0, %cst_57 {dimension_numbers = #tpu.dot_dimension_numbers<[1], [0], [0], [1], [0, 0, 1, 1], [], []>} : vector<8x32xf32>, vector<32x128xf32>, vector<8x128xf32> -> vector<8x128xf32>
    %155 = arith.addf %43, %154 : vector<8x128xf32>
    %156 = arith.negf %155 : vector<8x128xf32>
    %157 = math.exp %156 : vector<8x128xf32>
    %cst_58 = arith.constant 1.000000e+00 : f32
    %158 = vector.broadcast %cst_58 : f32 to vector<8x128xf32>
    %159 = arith.addf %158, %157 : vector<8x128xf32>
    %160 = arith.divf %158, %159 : vector<8x128xf32>
    %161 = math.tanh %155 : vector<8x128xf32>
    %162 = vector.extract_strided_slice %160 {offsets = [0, 0], sizes = [8, 32], strides = [1, 1]} : vector<8x128xf32> to vector<8x32xf32>
    %163 = vector.extract_strided_slice %160 {offsets = [0, 32], sizes = [8, 32], strides = [1, 1]} : vector<8x128xf32> to vector<8x32xf32>
    %164 = vector.extract_strided_slice %160 {offsets = [0, 96], sizes = [8, 32], strides = [1, 1]} : vector<8x128xf32> to vector<8x32xf32>
    %165 = vector.extract_strided_slice %161 {offsets = [0, 64], sizes = [8, 32], strides = [1, 1]} : vector<8x128xf32> to vector<8x32xf32>
    %166 = arith.mulf %163, %151 : vector<8x32xf32>
    %167 = arith.mulf %162, %165 : vector<8x32xf32>
    %168 = arith.addf %166, %167 : vector<8x32xf32>
    %169 = math.tanh %168 : vector<8x32xf32>
    %170 = arith.mulf %164, %169 : vector<8x32xf32>
    %cst_59 = arith.constant dense<0.000000e+00> : vector<8x128xf32>
    %171 = tpu.matmul %170, %0, %cst_59 {dimension_numbers = #tpu.dot_dimension_numbers<[1], [0], [0], [1], [0, 0, 1, 1], [], []>} : vector<8x32xf32>, vector<32x128xf32>, vector<8x128xf32> -> vector<8x128xf32>
    %172 = arith.addf %49, %171 : vector<8x128xf32>
    %173 = arith.negf %172 : vector<8x128xf32>
    %174 = math.exp %173 : vector<8x128xf32>
    %cst_60 = arith.constant 1.000000e+00 : f32
    %175 = vector.broadcast %cst_60 : f32 to vector<8x128xf32>
    %176 = arith.addf %175, %174 : vector<8x128xf32>
    %177 = arith.divf %175, %176 : vector<8x128xf32>
    %178 = math.tanh %172 : vector<8x128xf32>
    %179 = vector.extract_strided_slice %177 {offsets = [0, 0], sizes = [8, 32], strides = [1, 1]} : vector<8x128xf32> to vector<8x32xf32>
    %180 = vector.extract_strided_slice %177 {offsets = [0, 32], sizes = [8, 32], strides = [1, 1]} : vector<8x128xf32> to vector<8x32xf32>
    %181 = vector.extract_strided_slice %177 {offsets = [0, 96], sizes = [8, 32], strides = [1, 1]} : vector<8x128xf32> to vector<8x32xf32>
    %182 = vector.extract_strided_slice %178 {offsets = [0, 64], sizes = [8, 32], strides = [1, 1]} : vector<8x128xf32> to vector<8x32xf32>
    %183 = arith.mulf %180, %168 : vector<8x32xf32>
    %184 = arith.mulf %179, %182 : vector<8x32xf32>
    %185 = arith.addf %183, %184 : vector<8x32xf32>
    %186 = math.tanh %185 : vector<8x32xf32>
    %187 = arith.mulf %181, %186 : vector<8x32xf32>
    %c0_61 = arith.constant 0 : index
    %c0_62 = arith.constant 0 : index
    %188 = vector.load %arg5[%c0_61, %c0_62] : memref<32x4xf32, #tpu.memory_space<vmem>>, vector<32x4xf32>
    %cst_63 = arith.constant dense<0.000000e+00> : vector<8x4xf32>
    %189 = tpu.matmul %187, %188, %cst_63 {dimension_numbers = #tpu.dot_dimension_numbers<[1], [0], [0], [1], [0, 0, 1, 1], [], []>} : vector<8x32xf32>, vector<32x4xf32>, vector<8x4xf32> -> vector<8x4xf32>
    %c0_64 = arith.constant 0 : index
    %c0_65 = arith.constant 0 : index
    %190 = vector.load %arg6[%c0_64, %c0_65] : memref<1x4xf32, #tpu.memory_space<vmem>>, vector<1x4xf32>
    %191 = vector.broadcast %190 : vector<1x4xf32> to vector<8x4xf32>
    %192 = arith.addf %189, %191 : vector<8x4xf32>
    %193 = arith.negf %192 : vector<8x4xf32>
    %194 = math.exp %193 : vector<8x4xf32>
    %cst_66 = arith.constant 1.000000e+00 : f32
    %195 = vector.broadcast %cst_66 : f32 to vector<8x4xf32>
    %196 = arith.addf %195, %194 : vector<8x4xf32>
    %197 = arith.divf %195, %196 : vector<8x4xf32>
    %c0_67 = arith.constant 0 : index
    %c0_68 = arith.constant 0 : index
    %198 = vector.load %arg7[%c0_67, %c0_68] : memref<8x4xf32, #tpu.memory_space<vmem>>, vector<8x4xf32>
    tpu.vector_store %arg7[%c0_67, %c0_68], %197 {strides = array<i32>} : memref<8x4xf32, #tpu.memory_space<vmem>>, vector<8x4xf32>,
    return
  }
  func.func @transform_0(%arg0: i32) -> (i32, i32, i32) {
    %c0_i32 = arith.constant 0 : i32
    %c0_i32_0 = arith.constant 0 : i32
    %c0_i32_1 = arith.constant 0 : i32
    return %c0_i32, %arg0, %c0_i32_0 : i32, i32, i32
  }
  func.func @transform_1(%arg0: i32) -> (i32, i32) {
    %c0_i32 = arith.constant 0 : i32
    %c0_i32_0 = arith.constant 0 : i32
    %c0_i32_1 = arith.constant 0 : i32
    return %c0_i32, %c0_i32_0 : i32, i32
  }
  func.func @transform_2(%arg0: i32) -> (i32, i32) {
    %c0_i32 = arith.constant 0 : i32
    %c0_i32_0 = arith.constant 0 : i32
    %c0_i32_1 = arith.constant 0 : i32
    return %c0_i32, %c0_i32_0 : i32, i32
  }
  func.func @transform_3(%arg0: i32) -> (i32, i32) {
    %c0_i32 = arith.constant 0 : i32
    %c0_i32_0 = arith.constant 0 : i32
    %c0_i32_1 = arith.constant 0 : i32
    return %c0_i32, %c0_i32_0 : i32, i32
  }
  func.func @transform_4(%arg0: i32) -> (i32, i32) {
    %c0_i32 = arith.constant 0 : i32
    %c0_i32_0 = arith.constant 0 : i32
    %c0_i32_1 = arith.constant 0 : i32
    return %c0_i32, %c0_i32_0 : i32, i32
  }
  func.func @transform_5(%arg0: i32) -> (i32, i32) {
    %c0_i32 = arith.constant 0 : i32
    %c0_i32_0 = arith.constant 0 : i32
    %c0_i32_1 = arith.constant 0 : i32
    return %c0_i32, %c0_i32_0 : i32, i32
  }
  func.func @transform_6(%arg0: i32) -> (i32, i32) {
    %c0_i32 = arith.constant 0 : i32
    %c0_i32_0 = arith.constant 0 : i32
    return %arg0, %c0_i32 : i32, i32
  }
}

</mosaic_0001>

<llo_original>
// kernel: tpu_custom_call.1
$region0: #{tpu_custom_call.1}
  #allocation0 [shape = 'u32[]', space=smem, size = 0x4, offset = 0x4, fixed_abs, tag = 'smem constant byte address 0x4 - core index']
  #allocation1 [shape = 'u32[144,128]{1,0:T(1,128)}', space=vmem, size = 0x12000, scoped, tag = 'internal scratch']
  %s0 = inlined_call_operand.hbm [shape: f32[8,8,16], index: 0, kind: input, shape index: {}]
  %s1 = inlined_call_operand.hbm [shape: f32[16,128], index: 1, kind: input, shape index: {}]
  %s2 = inlined_call_operand.vmem [shape: f32[32,128], index: 2, kind: input, shape index: {}]
  %s3 = inlined_call_operand.vmem [shape: f32[1,128], index: 3, kind: input, shape index: {}]
  %s4 = inlined_call_operand.vmem [shape: f32[32,4], index: 4, kind: input, shape index: {}]
  %s5 = inlined_call_operand.vmem [shape: f32[1,4], index: 5, kind: input, shape index: {}]
  %s6 = inlined_call_operand.vmem [shape: f32[8,4], index: 6, kind: output, shape index: {}]
  %s7 = sld [smem:[#allocation0]]
  $region42: #{tpu_custom_call.1} parent=0
    _
  %s9 = ssub.s32 1, %s7
  %s10 = scalar_select 0, %s9, %s7
  $region1: #{tpu_custom_call.1} parent=0
    #allocation2 [shape = 'u8[32768]{0}', space=vmem, size = 0x8000, scoped, tag = 'input window, operand 0, single buffered']
    #allocation3 [shape = 's32[1]{0}', space=sflag, size = 0x4, scoped, tag = 'scoped memory for tpu_custom_call.1']
    #allocation4 [shape = 'u8[8192]{0}', space=vmem, size = 0x2000, scoped, tag = 'input window, operand 1, single buffered']
    #allocation5 [shape = 's32[1]{0}', space=sflag, size = 0x4, scoped, tag = 'scoped memory for tpu_custom_call.1']
    %11 = vsyncpa [#allocation3], 0
    %12 = vsyncpa [#allocation5], 0
    // Predicated region
    $region2: #{tpu_custom_call.1} parent=1 // pred_check
      _
    $region3: #{tpu_custom_call.1} parent=1 // pred_check_branch
      %14 = sbr.rel (0) target = $region5
    $region4: #{tpu_custom_call.1} parent=1 // pred_region
      %s16 = ssub.s32 1024, 1024
      %17 = vsyncadd [#allocation3], %s16
      %s18 = sshll.u32 [#allocation2], 4
      %s19 = int_to_ptr.vmem [resolvable:$true] %s18
      %24 = dma.hbm_to_vmem [thread:$0]  %s0, 1024, %s19, [#allocation3], 128, 128, 8
    $region5: #{tpu_custom_call.1} parent=1 // pred_fallthru
      _
    // Predicated region
    $region6: #{tpu_custom_call.1} parent=1 // pred_check
      _
    $region7: #{tpu_custom_call.1} parent=1 // pred_check_branch
      %26 = sbr.rel (0) target = $region9
    $region8: #{tpu_custom_call.1} parent=1 // pred_region
      %s28 = ssub.s32 256, 256
      %29 = vsyncadd [#allocation5], %s28
      %s30 = sshll.u32 [#allocation4], 4
      %s31 = int_to_ptr.vmem [resolvable:$true] %s30
      %36 = dma.hbm_to_vmem [thread:$0]  %s1, 256, %s31, [#allocation5], 128, 128, 8
    $region9: #{tpu_custom_call.1} parent=1 // pred_fallthru
      _
    // Predicated region
    $region10: #{tpu_custom_call.1} parent=1 // pred_check
      _
    $region11: #{tpu_custom_call.1} parent=1 // pred_check_branch
      %38 = sbr.rel (0) target = $region13
    $region12: #{tpu_custom_call.1} parent=1 // pred_region
      _
    $region13: #{tpu_custom_call.1} parent=1 // pred_fallthru
      _
    // Predicated region
    $region14: #{tpu_custom_call.1} parent=1 // pred_check
      _
    $region15: #{tpu_custom_call.1} parent=1 // pred_check_branch
      %40 = sbr.rel (0) target = $region17
    $region16: #{tpu_custom_call.1} parent=1 // pred_region
      _
    $region17: #{tpu_custom_call.1} parent=1 // pred_fallthru
      _
    // Predicated region
    $region18: #{tpu_custom_call.1} parent=1 // pred_check
      _
    $region19: #{tpu_custom_call.1} parent=1 // pred_check_branch
      %42 = sbr.rel (0) target = $region21
    $region20: #{tpu_custom_call.1} parent=1 // pred_region
      _
    $region21: #{tpu_custom_call.1} parent=1 // pred_fallthru
      _
    // Predicated region
    $region22: #{tpu_custom_call.1} parent=1 // pred_check
      _
    $region23: #{tpu_custom_call.1} parent=1 // pred_check_branch
      %44 = sbr.rel (0) target = $region25
    $region24: #{tpu_custom_call.1} parent=1 // pred_region
      _
    $region25: #{tpu_custom_call.1} parent=1 // pred_fallthru
      _
    // Predicated region
    $region26: #{tpu_custom_call.1} parent=1 // pred_check
      _
    $region27: #{tpu_custom_call.1} parent=1 // pred_check_branch
      %46 = sbr.rel (0) target = $region29
    $region28: #{tpu_custom_call.1} parent=1 // pred_region
      %47 = dma.done [#allocation3], 1024
    $region29: #{tpu_custom_call.1} parent=1 // pred_fallthru
      _
    // Predicated region
    $region30: #{tpu_custom_call.1} parent=1 // pred_check
      _
    $region31: #{tpu_custom_call.1} parent=1 // pred_check_branch
      %49 = sbr.rel (0) target = $region33
    $region32: #{tpu_custom_call.1} parent=1 // pred_region
      %50 = dma.done [#allocation5], 256
    $region33: #{tpu_custom_call.1} parent=1 // pred_fallthru
      _
    %v51 = vld [vmem:[%s2] sm:$0xff]
    %v52 = vld [vmem:[%s2 + $0x8] sm:$0xff]
    %v53 = vld [vmem:[%s2 + $0x10] sm:$0xff]
    %v54 = vld [vmem:[%s2 + $0x18] sm:$0xff]
    %v55 = vld [vmem:[%s3] sm:$0x1]
    %v56 = vld [vmem:[#allocation2] sm:$0xff]
    %v57 = vld [vmem:[#allocation4] sm:$0xff]
    %v58 = vld [vmem:[#allocation4 + $0x8] sm:$0xff]
    %v60 = vlaneseq
    %v61 = vshrl.u32 %v60, 7
    %v62 = vsub.s32 0, %v61
    %v63 = vrot.slane %v55, %v62
    %vm65 = vcmask 130048
    %v67 = vsel %vm65, %v56, 0
    %69 = vmatprep.subr.mxu0 0.0
    %70 = vmatpush1.msra.mxu0 %v57
    %71 = vmatprep.subr.mxu0 0.0
    %72 = vmatpush1.msra.mxu0 %v58
    %73 = vmatprep.subr.mxu0 0.0
    %74 = vmatpush1.msra.mxu0 0.0
    %75 = vmatprep.subr.mxu0 0.0
    %76 = vmatpush1.msra.mxu0 0.0
    %77 = vmatprep.subr.mxu0 0.0
    %78 = vmatpush1.msra.mxu0 0.0
    %79 = vmatprep.subr.mxu0 0.0
    %80 = vmatpush1.msra.mxu0 0.0
    %81 = vmatprep.subr.mxu0 0.0
    %82 = vmatpush1.msra.mxu0 0.0
    %83 = vmatprep.subr.mxu0 0.0
    %84 = vmatpush1.msra.mxu0 0.0
    %85 = vmatprep.subr.mxu0 0.0
    %86 = vmatpush1.msra.mxu0 0.0
    %87 = vmatprep.subr.mxu0 0.0
    %88 = vmatpush1.msra.mxu0 0.0
    %89 = vmatprep.subr.mxu0 0.0
    %90 = vmatpush1.msra.mxu0 0.0
    %91 = vmatprep.subr.mxu0 0.0
    %92 = vmatpush1.msra.mxu0 0.0
    %93 = vmatprep.subr.mxu0 0.0
    %94 = vmatpush1.msra.mxu0 0.0
    %95 = vmatprep.subr.mxu0 0.0
    %96 = vmatpush1.msra.mxu0 0.0
    %97 = vmatprep.subr.mxu0 0.0
    %98 = vmatpush1.msra.mxu0 0.0
    %99 = vmatprep.subr.mxu0 0.0
    %100 = vmatpush1.msra.mxu0 0.0
    %101 = vmatprep.subr.mxu0 0.0
    %102 = vmatpush1.msra.mxu0 0.0
    %103 = vmatprep.subr.mxu0 0.0
    %104 = vmatpush1.msra.mxu0 0.0
    %105 = vmatprep.subr.mxu0 0.0
    %106 = vmatpush1.msra.mxu0 0.0
    %107 = vmatprep.subr.mxu0 0.0
    %108 = vmatpush1.msra.mxu0 0.0
    %109 = vmatprep.subr.mxu0 0.0
    %110 = vmatpush1.msra.mxu0 0.0
    %111 = vmatprep.subr.mxu0 0.0
    %112 = vmatpush1.msra.mxu0 0.0
    %113 = vmatprep.subr.mxu0 0.0
    %114 = vmatpush1.msra.mxu0 0.0
    %115 = vmatprep.subr.mxu0 0.0
    %116 = vmatpush1.msra.mxu0 0.0
    %117 = vmatprep.subr.mxu0 0.0
    %118 = vmatpush1.msra.mxu0 0.0
    %119 = vmatprep.subr.mxu0 0.0
    %120 = vmatpush1.msra.mxu0 0.0
    %121 = vmatprep.subr.mxu0 0.0
    %122 = vmatpush1.msra.mxu0 0.0
    %123 = vmatprep.subr.mxu0 0.0
    %124 = vmatpush1.msra.mxu0 0.0
    %125 = vmatprep.subr.mxu0 0.0
    %126 = vmatpush1.msra.mxu0 0.0
    %127 = vmatprep.subr.mxu0 0.0
    %128 = vmatpush1.msra.mxu0 0.0
    %129 = vmatprep.subr.mxu0 0.0
    %130 = vmatpush1.msra.mxu0 0.0
    %131 = vmatprep.subr.mxu0 0.0
    %132 = vmatpush1.msra.mxu0 0.0
    %133 = vmatprep.mubr.f32.mxu0 0.0
    %134 = vmatmul.mubr.f32.gmra.mrb[0].mxu0 %v67
    %v135 = vpop.f32.mrb[0].mxu0
    %v136 = vadd.f32 %v63, %v135
    %v137 = vpop.f32.mrb[0].mxu0
    %138 = vdwg.mxu0
    %s139 = scalar_lea.vmem [#allocation2], 8
    %v140 = vld [vmem:[%s139] sm:$0xff]
    %v142 = vsel %vm65, %v140, 0
    %144 = vmatprep.subr.mxu0 0.0
    %145 = vmatpush1.msra.mxu0 %v57
    %146 = vmatprep.subr.mxu0 0.0
    %147 = vmatpush1.msra.mxu0 %v58
    %148 = vmatprep.subr.mxu0 0.0
    %149 = vmatpush1.msra.mxu0 0.0
    %150 = vmatprep.subr.mxu0 0.0
    %151 = vmatpush1.msra.mxu0 0.0
    %152 = vmatprep.subr.mxu0 0.0
    %153 = vmatpush1.msra.mxu0 0.0
    %154 = vmatprep.subr.mxu0 0.0
    %155 = vmatpush1.msra.mxu0 0.0
    %156 = vmatprep.subr.mxu0 0.0
    %157 = vmatpush1.msra.mxu0 0.0
    %158 = vmatprep.subr.mxu0 0.0
    %159 = vmatpush1.msra.mxu0 0.0
    %160 = vmatprep.subr.mxu0 0.0
    %161 = vmatpush1.msra.mxu0 0.0
    %162 = vmatprep.subr.mxu0 0.0
    %163 = vmatpush1.msra.mxu0 0.0
    %164 = vmatprep.subr.mxu0 0.0
    %165 = vmatpush1.msra.mxu0 0.0
    %166 = vmatprep.subr.mxu0 0.0
    %167 = vmatpush1.msra.mxu0 0.0
    %168 = vmatprep.subr.mxu0 0.0
    %169 = vmatpush1.msra.mxu0 0.0
    %170 = vmatprep.subr.mxu0 0.0
    %171 = vmatpush1.msra.mxu0 0.0
    %172 = vmatprep.subr.mxu0 0.0
    %173 = vmatpush1.msra.mxu0 0.0
    %174 = vmatprep.subr.mxu0 0.0
    %175 = vmatpush1.msra.mxu0 0.0
    %176 = vmatprep.subr.mxu0 0.0
    %177 = vmatpush1.msra.mxu0 0.0
    %178 = vmatprep.subr.mxu0 0.0
    %179 = vmatpush1.msra.mxu0 0.0
    %180 = vmatprep.subr.mxu0 0.0
    %181 = vmatpush1.msra.mxu0 0.0
    %182 = vmatprep.subr.mxu0 0.0
    %183 = vmatpush1.msra.mxu0 0.0
    %184 = vmatprep.subr.mxu0 0.0
    %185 = vmatpush1.msra.mxu0 0.0
    %186 = vmatprep.subr.mxu0 0.0
    %187 = vmatpush1.msra.mxu0 0.0
    %188 = vmatprep.subr.mxu0 0.0
    %189 = vmatpush1.msra.mxu0 0.0
    %190 = vmatprep.subr.mxu0 0.0
    %191 = vmatpush1.msra.mxu0 0.0
    %192 = vmatprep.subr.mxu0 0.0
    %193 = vmatpush1.msra.mxu0 0.0
    %194 = vmatprep.subr.mxu0 0.0
    %195 = vmatpush1.msra.mxu0 0.0
    %196 = vmatprep.subr.mxu0 0.0
    %197 = vmatpush1.msra.mxu0 0.0
    %198 = vmatprep.subr.mxu0 0.0
    %199 = vmatpush1.msra.mxu0 0.0
    %200 = vmatprep.subr.mxu0 0.0
    %201 = vmatpush1.msra.mxu0 0.0
    %202 = vmatprep.subr.mxu0 0.0
    %203 = vmatpush1.msra.mxu0 0.0
    %204 = vmatprep.subr.mxu0 0.0
    %205 = vmatpush1.msra.mxu0 0.0
    %206 = vmatprep.subr.mxu0 0.0
    %207 = vmatpush1.msra.mxu0 0.0
    %208 = vmatprep.mubr.f32.mxu0 0.0
    %209 = vmatmul.mubr.f32.gmra.mrb[0].mxu0 %v142
    %v210 = vpop.f32.mrb[0].mxu0
    %v211 = vadd.f32 %v63, %v210
    %v212 = vpop.f32.mrb[0].mxu0
    %213 = vdwg.mxu0
    %s214 = scalar_lea.vmem [#allocation2], 16
    %v215 = vld [vmem:[%s214] sm:$0xff]
    %v217 = vsel %vm65, %v215, 0
    %219 = vmatprep.subr.mxu0 0.0
    %220 = vmatpush1.msra.mxu0 %v57
    %221 = vmatprep.subr.mxu0 0.0
    %222 = vmatpush1.msra.mxu0 %v58
    %223 = vmatprep.subr.mxu0 0.0
    %224 = vmatpush1.msra.mxu0 0.0
    %225 = vmatprep.subr.mxu0 0.0
    %226 = vmatpush1.msra.mxu0 0.0
    %227 = vmatprep.subr.mxu0 0.0
    %228 = vmatpush1.msra.mxu0 0.0
    %229 = vmatprep.subr.mxu0 0.0
    %230 = vmatpush1.msra.mxu0 0.0
    %231 = vmatprep.subr.mxu0 0.0
    %232 = vmatpush1.msra.mxu0 0.0
    %233 = vmatprep.subr.mxu0 0.0
    %234 = vmatpush1.msra.mxu0 0.0
    %235 = vmatprep.subr.mxu0 0.0
    %236 = vmatpush1.msra.mxu0 0.0
    %237 = vmatprep.subr.mxu0 0.0
    %238 = vmatpush1.msra.mxu0 0.0
    %239 = vmatprep.subr.mxu0 0.0
    %240 = vmatpush1.msra.mxu0 0.0
    %241 = vmatprep.subr.mxu0 0.0
    %242 = vmatpush1.msra.mxu0 0.0
    %243 = vmatprep.subr.mxu0 0.0
    %244 = vmatpush1.msra.mxu0 0.0
    %245 = vmatprep.subr.mxu0 0.0
    %246 = vmatpush1.msra.mxu0 0.0
    %247 = vmatprep.subr.mxu0 0.0
    %248 = vmatpush1.msra.mxu0 0.0
    %249 = vmatprep.subr.mxu0 0.0
    %250 = vmatpush1.msra.mxu0 0.0
    %251 = vmatprep.subr.mxu0 0.0
    %252 = vmatpush1.msra.mxu0 0.0
    %253 = vmatprep.subr.mxu0 0.0
    %254 = vmatpush1.msra.mxu0 0.0
    %255 = vmatprep.subr.mxu0 0.0
    %256 = vmatpush1.msra.mxu0 0.0
    %257 = vmatprep.subr.mxu0 0.0
    %258 = vmatpush1.msra.mxu0 0.0
    %259 = vmatprep.subr.mxu0 0.0
    %260 = vmatpush1.msra.mxu0 0.0
    %261 = vmatprep.subr.mxu0 0.0
    %262 = vmatpush1.msra.mxu0 0.0
    %263 = vmatprep.subr.mxu0 0.0
    %264 = vmatpush1.msra.mxu0 0.0
    %265 = vmatprep.subr.mxu0 0.0
    %266 = vmatpush1.msra.mxu0 0.0
    %267 = vmatprep.subr.mxu0 0.0
    %268 = vmatpush1.msra.mxu0 0.0
    %269 = vmatprep.subr.mxu0 0.0
    %270 = vmatpush1.msra.mxu0 0.0
    %271 = vmatprep.subr.mxu0 0.0
    %272 = vmatpush1.msra.mxu0 0.0
    %273 = vmatprep.subr.mxu0 0.0
    %274 = vmatpush1.msra.mxu0 0.0
    %275 = vmatprep.subr.mxu0 0.0
    %276 = vmatpush1.msra.mxu0 0.0
    %277 = vmatprep.subr.mxu0 0.0
    %278 = vmatpush1.msra.mxu0 0.0
    %279 = vmatprep.subr.mxu0 0.0
    %280 = vmatpush1.msra.mxu0 0.0
    %281 = vmatprep.subr.mxu0 0.0
    %282 = vmatpush1.msra.mxu0 0.0
    %283 = vmatprep.mubr.f32.mxu0 0.0
    %284 = vmatmul.mubr.f32.gmra.mrb[0].mxu0 %v217
    %v285 = vpop.f32.mrb[0].mxu0
    %v286 = vadd.f32 %v63, %v285
    %v287 = vpop.f32.mrb[0].mxu0
    %288 = vdwg.mxu0
    %s289 = scalar_lea.vmem [#allocation2], 24
    %v290 = vld [vmem:[%s289] sm:$0xff]
    %v292 = vsel %vm65, %v290, 0
    %294 = vmatprep.subr.mxu0 0.0
    %295 = vmatpush1.msra.mxu0 %v57
    %296 = vmatprep.subr.mxu0 0.0
    %297 = vmatpush1.msra.mxu0 %v58
    %298 = vmatprep.subr.mxu0 0.0
    %299 = vmatpush1.msra.mxu0 0.0
    %300 = vmatprep.subr.mxu0 0.0
    %301 = vmatpush1.msra.mxu0 0.0
    %302 = vmatprep.subr.mxu0 0.0
    %303 = vmatpush1.msra.mxu0 0.0
    %304 = vmatprep.subr.mxu0 0.0
    %305 = vmatpush1.msra.mxu0 0.0
    %306 = vmatprep.subr.mxu0 0.0
    %307 = vmatpush1.msra.mxu0 0.0
    %308 = vmatprep.subr.mxu0 0.0
    %309 = vmatpush1.msra.mxu0 0.0
    %310 = vmatprep.subr.mxu0 0.0
    %311 = vmatpush1.msra.mxu0 0.0
    %312 = vmatprep.subr.mxu0 0.0
    %313 = vmatpush1.msra.mxu0 0.0
    %314 = vmatprep.subr.mxu0 0.0
    %315 = vmatpush1.msra.mxu0 0.0
    %316 = vmatprep.subr.mxu0 0.0
    %317 = vmatpush1.msra.mxu0 0.0
    %318 = vmatprep.subr.mxu0 0.0
    %319 = vmatpush1.msra.mxu0 0.0
    %320 = vmatprep.subr.mxu0 0.0
    %321 = vmatpush1.msra.mxu0 0.0
    %322 = vmatprep.subr.mxu0 0.0
    %323 = vmatpush1.msra.mxu0 0.0
    %324 = vmatprep.subr.mxu0 0.0
    %325 = vmatpush1.msra.mxu0 0.0
    %326 = vmatprep.subr.mxu0 0.0
    %327 = vmatpush1.msra.mxu0 0.0
    %328 = vmatprep.subr.mxu0 0.0
    %329 = vmatpush1.msra.mxu0 0.0
    %330 = vmatprep.subr.mxu0 0.0
    %331 = vmatpush1.msra.mxu0 0.0
    %332 = vmatprep.subr.mxu0 0.0
    %333 = vmatpush1.msra.mxu0 0.0
    %334 = vmatprep.subr.mxu0 0.0
    %335 = vmatpush1.msra.mxu0 0.0
    %336 = vmatprep.subr.mxu0 0.0
    %337 = vmatpush1.msra.mxu0 0.0
    %338 = vmatprep.subr.mxu0 0.0
    %339 = vmatpush1.msra.mxu0 0.0
    %340 = vmatprep.subr.mxu0 0.0
    %341 = vmatpush1.msra.mxu0 0.0
    %342 = vmatprep.subr.mxu0 0.0
    %343 = vmatpush1.msra.mxu0 0.0
    %344 = vmatprep.subr.mxu0 0.0
    %345 = vmatpush1.msra.mxu0 0.0
    %346 = vmatprep.subr.mxu0 0.0
    %347 = vmatpush1.msra.mxu0 0.0
    %348 = vmatprep.subr.mxu0 0.0
    %349 = vmatpush1.msra.mxu0 0.0
    %350 = vmatprep.subr.mxu0 0.0
    %351 = vmatpush1.msra.mxu0 0.0
    %352 = vmatprep.subr.mxu0 0.0
    %353 = vmatpush1.msra.mxu0 0.0
    %354 = vmatprep.subr.mxu0 0.0
    %355 = vmatpush1.msra.mxu0 0.0
    %356 = vmatprep.subr.mxu0 0.0
    %357 = vmatpush1.msra.mxu0 0.0
    %358 = vmatprep.mubr.f32.mxu0 0.0
    %359 = vmatmul.mubr.f32.gmra.mrb[0].mxu0 %v292
    %v360 = vpop.f32.mrb[0].mxu0
    %v361 = vadd.f32 %v63, %v360
    %v362 = vpop.f32.mrb[0].mxu0
    %363 = vdwg.mxu0
    %s364 = scalar_lea.vmem [#allocation2], 32
    %v365 = vld [vmem:[%s364] sm:$0xff]
    %v367 = vsel %vm65, %v365, 0
    %369 = vmatprep.subr.mxu0 0.0
    %370 = vmatpush1.msra.mxu0 %v57
    %371 = vmatprep.subr.mxu0 0.0
    %372 = vmatpush1.msra.mxu0 %v58
    %373 = vmatprep.subr.mxu0 0.0
    %374 = vmatpush1.msra.mxu0 0.0
    %375 = vmatprep.subr.mxu0 0.0
    %376 = vmatpush1.msra.mxu0 0.0
    %377 = vmatprep.subr.mxu0 0.0
    %378 = vmatpush1.msra.mxu0 0.0
    %379 = vmatprep.subr.mxu0 0.0
    %380 = vmatpush1.msra.mxu0 0.0
    %381 = vmatprep.subr.mxu0 0.0
    %382 = vmatpush1.msra.mxu0 0.0
    %383 = vmatprep.subr.mxu0 0.0
    %384 = vmatpush1.msra.mxu0 0.0
    %385 = vmatprep.subr.mxu0 0.0
    %386 = vmatpush1.msra.mxu0 0.0
    %387 = vmatprep.subr.mxu0 0.0
    %388 = vmatpush1.msra.mxu0 0.0
    %389 = vmatprep.subr.mxu0 0.0
    %390 = vmatpush1.msra.mxu0 0.0
    %391 = vmatprep.subr.mxu0 0.0
    %392 = vmatpush1.msra.mxu0 0.0
    %393 = vmatprep.subr.mxu0 0.0
    %394 = vmatpush1.msra.mxu0 0.0
    %395 = vmatprep.subr.mxu0 0.0
    %396 = vmatpush1.msra.mxu0 0.0
    %397 = vmatprep.subr.mxu0 0.0
    %398 = vmatpush1.msra.mxu0 0.0
    %399 = vmatprep.subr.mxu0 0.0
    %400 = vmatpush1.msra.mxu0 0.0
    %401 = vmatprep.subr.mxu0 0.0
    %402 = vmatpush1.msra.mxu0 0.0
    %403 = vmatprep.subr.mxu0 0.0
    %404 = vmatpush1.msra.mxu0 0.0
    %405 = vmatprep.subr.mxu0 0.0
    %406 = vmatpush1.msra.mxu0 0.0
    %407 = vmatprep.subr.mxu0 0.0
    %408 = vmatpush1.msra.mxu0 0.0
    %409 = vmatprep.subr.mxu0 0.0
    %410 = vmatpush1.msra.mxu0 0.0
    %411 = vmatprep.subr.mxu0 0.0
    %412 = vmatpush1.msra.mxu0 0.0
    %413 = vmatprep.subr.mxu0 0.0
    %414 = vmatpush1.msra.mxu0 0.0
    %415 = vmatprep.subr.mxu0 0.0
    %416 = vmatpush1.msra.mxu0 0.0
    %417 = vmatprep.subr.mxu0 0.0
    %418 = vmatpush1.msra.mxu0 0.0
    %419 = vmatprep.subr.mxu0 0.0
    %420 = vmatpush1.msra.mxu0 0.0
    %421 = vmatprep.subr.mxu0 0.0
    %422 = vmatpush1.msra.mxu0 0.0
    %423 = vmatprep.subr.mxu0 0.0
    %424 = vmatpush1.msra.mxu0 0.0
    %425 = vmatprep.subr.mxu0 0.0
    %426 = vmatpush1.msra.mxu0 0.0
    %427 = vmatprep.subr.mxu0 0.0
    %428 = vmatpush1.msra.mxu0 0.0
    %429 = vmatprep.subr.mxu0 0.0
    %430 = vmatpush1.msra.mxu0 0.0
    %431 = vmatprep.subr.mxu0 0.0
    %432 = vmatpush1.msra.mxu0 0.0
    %433 = vmatprep.mubr.f32.mxu0 0.0
    %434 = vmatmul.mubr.f32.gmra.mrb[0].mxu0 %v367
    %v435 = vpop.f32.mrb[0].mxu0
    %v436 = vadd.f32 %v63, %v435
    %v437 = vpop.f32.mrb[0].mxu0
    %438 = vdwg.mxu0
    %s439 = scalar_lea.vmem [#allocation2], 40
    %v440 = vld [vmem:[%s439] sm:$0xff]
    %v442 = vsel %vm65, %v440, 0
    %444 = vmatprep.subr.mxu0 0.0
    %445 = vmatpush1.msra.mxu0 %v57
    %446 = vmatprep.subr.mxu0 0.0
    %447 = vmatpush1.msra.mxu0 %v58
    %448 = vmatprep.subr.mxu0 0.0
    %449 = vmatpush1.msra.mxu0 0.0
    %450 = vmatprep.subr.mxu0 0.0
    %451 = vmatpush1.msra.mxu0 0.0
    %452 = vmatprep.subr.mxu0 0.0
    %453 = vmatpush1.msra.mxu0 0.0
    %454 = vmatprep.subr.mxu0 0.0
    %455 = vmatpush1.msra.mxu0 0.0
    %456 = vmatprep.subr.mxu0 0.0
    %457 = vmatpush1.msra.mxu0 0.0
    %458 = vmatprep.subr.mxu0 0.0
    %459 = vmatpush1.msra.mxu0 0.0
    %460 = vmatprep.subr.mxu0 0.0
    %461 = vmatpush1.msra.mxu0 0.0
    %462 = vmatprep.subr.mxu0 0.0
    %463 = vmatpush1.msra.mxu0 0.0
    %464 = vmatprep.subr.mxu0 0.0
    %465 = vmatpush1.msra.mxu0 0.0
    %466 = vmatprep.subr.mxu0 0.0
    %467 = vmatpush1.msra.mxu0 0.0
    %468 = vmatprep.subr.mxu0 0.0
    %469 = vmatpush1.msra.mxu0 0.0
    %470 = vmatprep.subr.mxu0 0.0
    %471 = vmatpush1.msra.mxu0 0.0
    %472 = vmatprep.subr.mxu0 0.0
    %473 = vmatpush1.msra.mxu0 0.0
    %474 = vmatprep.subr.mxu0 0.0
    %475 = vmatpush1.msra.mxu0 0.0
    %476 = vmatprep.subr.mxu0 0.0
    %477 = vmatpush1.msra.mxu0 0.0
    %478 = vmatprep.subr.mxu0 0.0
    %479 = vmatpush1.msra.mxu0 0.0
    %480 = vmatprep.subr.mxu0 0.0
    %481 = vmatpush1.msra.mxu0 0.0
    %482 = vmatprep.subr.mxu0 0.0
    %483 = vmatpush1.msra.mxu0 0.0
    %484 = vmatprep.subr.mxu0 0.0
    %485 = vmatpush1.msra.mxu0 0.0
    %486 = vmatprep.subr.mxu0 0.0
    %487 = vmatpush1.msra.mxu0 0.0
    %488 = vmatprep.subr.mxu0 0.0
    %489 = vmatpush1.msra.mxu0 0.0
    %490 = vmatprep.subr.mxu0 0.0
    %491 = vmatpush1.msra.mxu0 0.0
    %492 = vmatprep.subr.mxu0 0.0
    %493 = vmatpush1.msra.mxu0 0.0
    %494 = vmatprep.subr.mxu0 0.0
    %495 = vmatpush1.msra.mxu0 0.0
    %496 = vmatprep.subr.mxu0 0.0
    %497 = vmatpush1.msra.mxu0 0.0
    %498 = vmatprep.subr.mxu0 0.0
    %499 = vmatpush1.msra.mxu0 0.0
    %500 = vmatprep.subr.mxu0 0.0
    %501 = vmatpush1.msra.mxu0 0.0
    %502 = vmatprep.subr.mxu0 0.0
    %503 = vmatpush1.msra.mxu0 0.0
    %504 = vmatprep.subr.mxu0 0.0
    %505 = vmatpush1.msra.mxu0 0.0
    %506 = vmatprep.subr.mxu0 0.0
    %507 = vmatpush1.msra.mxu0 0.0
    %508 = vmatprep.mubr.f32.mxu0 0.0
    %509 = vmatmul.mubr.f32.gmra.mrb[0].mxu0 %v442
    %v510 = vpop.f32.mrb[0].mxu0
    %v511 = vadd.f32 %v63, %v510
    %v512 = vpop.f32.mrb[0].mxu0
    %513 = vdwg.mxu0
    %s514 = scalar_lea.vmem [#allocation2], 48
    %v515 = vld [vmem:[%s514] sm:$0xff]
    %v517 = vsel %vm65, %v515, 0
    %519 = vmatprep.subr.mxu0 0.0
    %520 = vmatpush1.msra.mxu0 %v57
    %521 = vmatprep.subr.mxu0 0.0
    %522 = vmatpush1.msra.mxu0 %v58
    %523 = vmatprep.subr.mxu0 0.0
    %524 = vmatpush1.msra.mxu0 0.0
    %525 = vmatprep.subr.mxu0 0.0
    %526 = vmatpush1.msra.mxu0 0.0
    %527 = vmatprep.subr.mxu0 0.0
    %528 = vmatpush1.msra.mxu0 0.0
    %529 = vmatprep.subr.mxu0 0.0
    %530 = vmatpush1.msra.mxu0 0.0
    %531 = vmatprep.subr.mxu0 0.0
    %532 = vmatpush1.msra.mxu0 0.0
    %533 = vmatprep.subr.mxu0 0.0
    %534 = vmatpush1.msra.mxu0 0.0
    %535 = vmatprep.subr.mxu0 0.0
    %536 = vmatpush1.msra.mxu0 0.0
    %537 = vmatprep.subr.mxu0 0.0
    %538 = vmatpush1.msra.mxu0 0.0
    %539 = vmatprep.subr.mxu0 0.0
    %540 = vmatpush1.msra.mxu0 0.0
    %541 = vmatprep.subr.mxu0 0.0
    %542 = vmatpush1.msra.mxu0 0.0
    %543 = vmatprep.subr.mxu0 0.0
    %544 = vmatpush1.msra.mxu0 0.0
    %545 = vmatprep.subr.mxu0 0.0
    %546 = vmatpush1.msra.mxu0 0.0
    %547 = vmatprep.subr.mxu0 0.0
    %548 = vmatpush1.msra.mxu0 0.0
    %549 = vmatprep.subr.mxu0 0.0
    %550 = vmatpush1.msra.mxu0 0.0
    %551 = vmatprep.subr.mxu0 0.0
    %552 = vmatpush1.msra.mxu0 0.0
    %553 = vmatprep.subr.mxu0 0.0
    %554 = vmatpush1.msra.mxu0 0.0
    %555 = vmatprep.subr.mxu0 0.0
    %556 = vmatpush1.msra.mxu0 0.0
    %557 = vmatprep.subr.mxu0 0.0
    %558 = vmatpush1.msra.mxu0 0.0
    %559 = vmatprep.subr.mxu0 0.0
    %560 = vmatpush1.msra.mxu0 0.0
    %561 = vmatprep.subr.mxu0 0.0
    %562 = vmatpush1.msra.mxu0 0.0
    %563 = vmatprep.subr.mxu0 0.0
    %564 = vmatpush1.msra.mxu0 0.0
    %565 = vmatprep.subr.mxu0 0.0
    %566 = vmatpush1.msra.mxu0 0.0
    %567 = vmatprep.subr.mxu0 0.0
    %568 = vmatpush1.msra.mxu0 0.0
    %569 = vmatprep.subr.mxu0 0.0
    %570 = vmatpush1.msra.mxu0 0.0
    %571 = vmatprep.subr.mxu0 0.0
    %572 = vmatpush1.msra.mxu0 0.0
    %573 = vmatprep.subr.mxu0 0.0
    %574 = vmatpush1.msra.mxu0 0.0
    %575 = vmatprep.subr.mxu0 0.0
    %576 = vmatpush1.msra.mxu0 0.0
    %577 = vmatprep.subr.mxu0 0.0
    %578 = vmatpush1.msra.mxu0 0.0
    %579 = vmatprep.subr.mxu0 0.0
    %580 = vmatpush1.msra.mxu0 0.0
    %581 = vmatprep.subr.mxu0 0.0
    %582 = vmatpush1.msra.mxu0 0.0
    %583 = vmatprep.mubr.f32.mxu0 0.0
    %584 = vmatmul.mubr.f32.gmra.mrb[0].mxu0 %v517
    %v585 = vpop.f32.mrb[0].mxu0
    %v586 = vadd.f32 %v63, %v585
    %v587 = vpop.f32.mrb[0].mxu0
    %588 = vdwg.mxu0
    %s589 = scalar_lea.vmem [#allocation2], 56
    %v590 = vld [vmem:[%s589] sm:$0xff]
    %v592 = vsel %vm65, %v590, 0
    %594 = vmatprep.subr.mxu0 0.0
    %595 = vmatpush1.msra.mxu0 %v57
    %596 = vmatprep.subr.mxu0 0.0
    %597 = vmatpush1.msra.mxu0 %v58
    %598 = vmatprep.subr.mxu0 0.0
    %599 = vmatpush1.msra.mxu0 0.0
    %600 = vmatprep.subr.mxu0 0.0
    %601 = vmatpush1.msra.mxu0 0.0
    %602 = vmatprep.subr.mxu0 0.0
    %603 = vmatpush1.msra.mxu0 0.0
    %604 = vmatprep.subr.mxu0 0.0
    %605 = vmatpush1.msra.mxu0 0.0
    %606 = vmatprep.subr.mxu0 0.0
    %607 = vmatpush1.msra.mxu0 0.0
    %608 = vmatprep.subr.mxu0 0.0
    %609 = vmatpush1.msra.mxu0 0.0
    %610 = vmatprep.subr.mxu0 0.0
    %611 = vmatpush1.msra.mxu0 0.0
    %612 = vmatprep.subr.mxu0 0.0
    %613 = vmatpush1.msra.mxu0 0.0
    %614 = vmatprep.subr.mxu0 0.0
    %615 = vmatpush1.msra.mxu0 0.0
    %616 = vmatprep.subr.mxu0 0.0
    %617 = vmatpush1.msra.mxu0 0.0
    %618 = vmatprep.subr.mxu0 0.0
    %619 = vmatpush1.msra.mxu0 0.0
    %620 = vmatprep.subr.mxu0 0.0
    %621 = vmatpush1.msra.mxu0 0.0
    %622 = vmatprep.subr.mxu0 0.0
    %623 = vmatpush1.msra.mxu0 0.0
    %624 = vmatprep.subr.mxu0 0.0
    %625 = vmatpush1.msra.mxu0 0.0
    %626 = vmatprep.subr.mxu0 0.0
    %627 = vmatpush1.msra.mxu0 0.0
    %628 = vmatprep.subr.mxu0 0.0
    %629 = vmatpush1.msra.mxu0 0.0
    %630 = vmatprep.subr.mxu0 0.0
    %631 = vmatpush1.msra.mxu0 0.0
    %632 = vmatprep.subr.mxu0 0.0
    %633 = vmatpush1.msra.mxu0 0.0
    %634 = vmatprep.subr.mxu0 0.0
    %635 = vmatpush1.msra.mxu0 0.0
    %636 = vmatprep.subr.mxu0 0.0
    %637 = vmatpush1.msra.mxu0 0.0
    %638 = vmatprep.subr.mxu0 0.0
    %639 = vmatpush1.msra.mxu0 0.0
    %640 = vmatprep.subr.mxu0 0.0
    %641 = vmatpush1.msra.mxu0 0.0
    %642 = vmatprep.subr.mxu0 0.0
    %643 = vmatpush1.msra.mxu0 0.0
    %644 = vmatprep.subr.mxu0 0.0
    %645 = vmatpush1.msra.mxu0 0.0
    %646 = vmatprep.subr.mxu0 0.0
    %647 = vmatpush1.msra.mxu0 0.0
    %648 = vmatprep.subr.mxu0 0.0
    %649 = vmatpush1.msra.mxu0 0.0
    %650 = vmatprep.subr.mxu0 0.0
    %651 = vmatpush1.msra.mxu0 0.0
    %652 = vmatprep.subr.mxu0 0.0
    %653 = vmatpush1.msra.mxu0 0.0
    %654 = vmatprep.subr.mxu0 0.0
    %655 = vmatpush1.msra.mxu0 0.0
    %656 = vmatprep.subr.mxu0 0.0
    %657 = vmatpush1.msra.mxu0 0.0
    %658 = vmatprep.mubr.f32.mxu0 0.0
    %659 = vmatmul.mubr.f32.gmra.mrb[0].mxu0 %v592
    %v660 = vpop.f32.mrb[0].mxu0
    %v661 = vadd.f32 %v63, %v660
    %v662 = vpop.f32.mrb[0].mxu0
    %663 = vdwg.mxu0
    %vm664 = vcmask 261120
    %v666 = vsel %vm664, 0.0, 0
    %668 = vmatprep.subr.mxu0 0.0
    %669 = vmatpush1.msra.mxu0 %v51
    %670 = vmatprep.subr.mxu0 0.0
    %671 = vmatpush1.msra.mxu0 %v52
    %672 = vmatprep.subr.mxu0 0.0
    %673 = vmatpush1.msra.mxu0 %v53
    %674 = vmatprep.subr.mxu0 0.0
    %675 = vmatpush1.msra.mxu0 %v54
    %676 = vmatprep.subr.mxu0 0.0
    %677 = vmatpush1.msra.mxu0 0.0
    %678 = vmatprep.subr.mxu0 0.0
    %679 = vmatpush1.msra.mxu0 0.0
    %680 = vmatprep.subr.mxu0 0.0
    %681 = vmatpush1.msra.mxu0 0.0
    %682 = vmatprep.subr.mxu0 0.0
    %683 = vmatpush1.msra.mxu0 0.0
    %684 = vmatprep.subr.mxu0 0.0
    %685 = vmatpush1.msra.mxu0 0.0
    %686 = vmatprep.subr.mxu0 0.0
    %687 = vmatpush1.msra.mxu0 0.0
    %688 = vmatprep.subr.mxu0 0.0
    %689 = vmatpush1.msra.mxu0 0.0
    %690 = vmatprep.subr.mxu0 0.0
    %691 = vmatpush1.msra.mxu0 0.0
    %692 = vmatprep.subr.mxu0 0.0
    %693 = vmatpush1.msra.mxu0 0.0
    %694 = vmatprep.subr.mxu0 0.0
    %695 = vmatpush1.msra.mxu0 0.0
    %696 = vmatprep.subr.mxu0 0.0
    %697 = vmatpush1.msra.mxu0 0.0
    %698 = vmatprep.subr.mxu0 0.0
    %699 = vmatpush1.msra.mxu0 0.0
    %700 = vmatprep.subr.mxu0 0.0
    %701 = vmatpush1.msra.mxu0 0.0
    %702 = vmatprep.subr.mxu0 0.0
    %703 = vmatpush1.msra.mxu0 0.0
    %704 = vmatprep.subr.mxu0 0.0
    %705 = vmatpush1.msra.mxu0 0.0
    %706 = vmatprep.subr.mxu0 0.0
    %707 = vmatpush1.msra.mxu0 0.0
    %708 = vmatprep.subr.mxu0 0.0
    %709 = vmatpush1.msra.mxu0 0.0
    %710 = vmatprep.subr.mxu0 0.0
    %711 = vmatpush1.msra.mxu0 0.0
    %712 = vmatprep.subr.mxu0 0.0
    %713 = vmatpush1.msra.mxu0 0.0
    %714 = vmatprep.subr.mxu0 0.0
    %715 = vmatpush1.msra.mxu0 0.0
    %716 = vmatprep.subr.mxu0 0.0
    %717 = vmatpush1.msra.mxu0 0.0
    %718 = vmatprep.subr.mxu0 0.0
    %719 = vmatpush1.msra.mxu0 0.0
    %720 = vmatprep.subr.mxu0 0.0
    %721 = vmatpush1.msra.mxu0 0.0
    %722 = vmatprep.subr.mxu0 0.0
    %723 = vmatpush1.msra.mxu0 0.0
    %724 = vmatprep.subr.mxu0 0.0
    %725 = vmatpush1.msra.mxu0 0.0
    %726 = vmatprep.subr.mxu0 0.0
    %727 = vmatpush1.msra.mxu0 0.0
    %728 = vmatprep.subr.mxu0 0.0
    %729 = vmatpush1.msra.mxu0 0.0
    %730 = vmatprep.subr.mxu0 0.0
    %731 = vmatpush1.msra.mxu0 0.0
    %732 = vmatprep.mubr.f32.mxu0 0.0
    %733 = vmatmul.mubr.f32.gmra.mrb[0].mxu0 %v666
    %v734 = vpop.f32.mrb[0].mxu0
    %v735 = vadd.f32 0.0, %v734
    %v736 = vpop.f32.mrb[0].mxu0
    %737 = vdwg.mxu0
    %v738 = vadd.f32 %v136, %v735
    %v739 = vxor.u32 %v738, 2147483648
    %v740 = vmul.f32 %v739, 1.442695
    %v741 = vpow.pop %v740
    %v742 = vadd.f32 %v741, 1.0
    %v743 = vrcp.pop %v742
    %v744 = vmul.f32 1.0, %v743
    %v745 = vtanh.pop %v738
    %v746 = vmul.f32 %v744, 0.0
    %748 = vrot.lane.b32.xlu0 %v745, 64
    %v749 = vpop.permute.xlu0 %748
    %v751 = vmul.f32 %v744, %v749
    %753 = vrot.lane.b32.xlu0 %v751, 32
    %v754 = vpop.permute.xlu0 %753
    %v756 = vadd.f32 %v746, %v754
    %v757 = vtanh.pop %v756
    %759 = vrot.lane.b32.xlu0 %v757, 64
    %v760 = vpop.permute.xlu0 %759
    %v762 = vmul.f32 %v744, %v760
    %764 = vrot.lane.b32.xlu0 %v762, 32
    %v765 = vpop.permute.xlu0 %764
    %v766 = vsel %vm664, %v765, 0
    %768 = vmatprep.subr.mxu0 0.0
    %769 = vmatpush1.msra.mxu0 %v51
    %770 = vmatprep.subr.mxu0 0.0
    %771 = vmatpush1.msra.mxu0 %v52
    %772 = vmatprep.subr.mxu0 0.0
    %773 = vmatpush1.msra.mxu0 %v53
    %774 = vmatprep.subr.mxu0 0.0
    %775 = vmatpush1.msra.mxu0 %v54
    %776 = vmatprep.subr.mxu0 0.0
    %777 = vmatpush1.msra.mxu0 0.0
    %778 = vmatprep.subr.mxu0 0.0
    %779 = vmatpush1.msra.mxu0 0.0
    %780 = vmatprep.subr.mxu0 0.0
    %781 = vmatpush1.msra.mxu0 0.0
    %782 = vmatprep.subr.mxu0 0.0
    %783 = vmatpush1.msra.mxu0 0.0
    %784 = vmatprep.subr.mxu0 0.0
    %785 = vmatpush1.msra.mxu0 0.0
    %786 = vmatprep.subr.mxu0 0.0
    %787 = vmatpush1.msra.mxu0 0.0
    %788 = vmatprep.subr.mxu0 0.0
    %789 = vmatpush1.msra.mxu0 0.0
    %790 = vmatprep.subr.mxu0 0.0
    %791 = vmatpush1.msra.mxu0 0.0
    %792 = vmatprep.subr.mxu0 0.0
    %793 = vmatpush1.msra.mxu0 0.0
    %794 = vmatprep.subr.mxu0 0.0
    %795 = vmatpush1.msra.mxu0 0.0
    %796 = vmatprep.subr.mxu0 0.0
    %797 = vmatpush1.msra.mxu0 0.0
    %798 = vmatprep.subr.mxu0 0.0
    %799 = vmatpush1.msra.mxu0 0.0
    %800 = vmatprep.subr.mxu0 0.0
    %801 = vmatpush1.msra.mxu0 0.0
    %802 = vmatprep.subr.mxu0 0.0
    %803 = vmatpush1.msra.mxu0 0.0
    %804 = vmatprep.subr.mxu0 0.0
    %805 = vmatpush1.msra.mxu0 0.0
    %806 = vmatprep.subr.mxu0 0.0
    %807 = vmatpush1.msra.mxu0 0.0
    %808 = vmatprep.subr.mxu0 0.0
    %809 = vmatpush1.msra.mxu0 0.0
    %810 = vmatprep.subr.mxu0 0.0
    %811 = vmatpush1.msra.mxu0 0.0
    %812 = vmatprep.subr.mxu0 0.0
    %813 = vmatpush1.msra.mxu0 0.0
    %814 = vmatprep.subr.mxu0 0.0
    %815 = vmatpush1.msra.mxu0 0.0
    %816 = vmatprep.subr.mxu0 0.0
    %817 = vmatpush1.msra.mxu0 0.0
    %818 = vmatprep.subr.mxu0 0.0
    %819 = vmatpush1.msra.mxu0 0.0
    %820 = vmatprep.subr.mxu0 0.0
    %821 = vmatpush1.msra.mxu0 0.0
    %822 = vmatprep.subr.mxu0 0.0
    %823 = vmatpush1.msra.mxu0 0.0
    %824 = vmatprep.subr.mxu0 0.0
    %825 = vmatpush1.msra.mxu0 0.0
    %826 = vmatprep.subr.mxu0 0.0
    %827 = vmatpush1.msra.mxu0 0.0
    %828 = vmatprep.subr.mxu0 0.0
    %829 = vmatpush1.msra.mxu0 0.0
    %830 = vmatprep.subr.mxu0 0.0
    %831 = vmatpush1.msra.mxu0 0.0
    %832 = vmatprep.mubr.f32.mxu0 0.0
    %833 = vmatmul.mubr.f32.gmra.mrb[0].mxu0 %v766
    %v834 = vpop.f32.mrb[0].mxu0
    %v835 = vadd.f32 0.0, %v834
    %v836 = vpop.f32.mrb[0].mxu0
    %837 = vdwg.mxu0
    %v838 = vadd.f32 %v211, %v835
    %v839 = vxor.u32 %v838, 2147483648
    %v840 = vmul.f32 %v839, 1.442695
    %v841 = vpow.pop %v840
    %v842 = vadd.f32 %v841, 1.0
    %v843 = vrcp.pop %v842
    %v844 = vmul.f32 1.0, %v843
    %v845 = vtanh.pop %v838
    %v846 = vmul.f32 %v844, %v756
    %848 = vrot.lane.b32.xlu0 %v845, 64
    %v849 = vpop.permute.xlu0 %848
    %v851 = vmul.f32 %v844, %v849
    %853 = vrot.lane.b32.xlu0 %v851, 32
    %v854 = vpop.permute.xlu0 %853
    %v856 = vadd.f32 %v846, %v854
    %v857 = vtanh.pop %v856
    %859 = vrot.lane.b32.xlu0 %v857, 64
    %v860 = vpop.permute.xlu0 %859
    %v862 = vmul.f32 %v844, %v860
    %864 = vrot.lane.b32.xlu0 %v862, 32
    %v865 = vpop.permute.xlu0 %864
    %v866 = vsel %vm664, %v865, 0
    %868 = vmatprep.subr.mxu0 0.0
    %869 = vmatpush1.msra.mxu0 %v51
    %870 = vmatprep.subr.mxu0 0.0
    %871 = vmatpush1.msra.mxu0 %v52
    %872 = vmatprep.subr.mxu0 0.0
    %873 = vmatpush1.msra.mxu0 %v53
    %874 = vmatprep.subr.mxu0 0.0
    %875 = vmatpush1.msra.mxu0 %v54
    %876 = vmatprep.subr.mxu0 0.0
    %877 = vmatpush1.msra.mxu0 0.0
    %878 = vmatprep.subr.mxu0 0.0
    %879 = vmatpush1.msra.mxu0 0.0
    %880 = vmatprep.subr.mxu0 0.0
    %881 = vmatpush1.msra.mxu0 0.0
    %882 = vmatprep.subr.mxu0 0.0
    %883 = vmatpush1.msra.mxu0 0.0
    %884 = vmatprep.subr.mxu0 0.0
    %885 = vmatpush1.msra.mxu0 0.0
    %886 = vmatprep.subr.mxu0 0.0
    %887 = vmatpush1.msra.mxu0 0.0
    %888 = vmatprep.subr.mxu0 0.0
    %889 = vmatpush1.msra.mxu0 0.0
    %890 = vmatprep.subr.mxu0 0.0
    %891 = vmatpush1.msra.mxu0 0.0
    %892 = vmatprep.subr.mxu0 0.0
    %893 = vmatpush1.msra.mxu0 0.0
    %894 = vmatprep.subr.mxu0 0.0
    %895 = vmatpush1.msra.mxu0 0.0
    %896 = vmatprep.subr.mxu0 0.0
    %897 = vmatpush1.msra.mxu0 0.0
    %898 = vmatprep.subr.mxu0 0.0
    %899 = vmatpush1.msra.mxu0 0.0
    %900 = vmatprep.subr.mxu0 0.0
    %901 = vmatpush1.msra.mxu0 0.0
    %902 = vmatprep.subr.mxu0 0.0
    %903 = vmatpush1.msra.mxu0 0.0
    %904 = vmatprep.subr.mxu0 0.0
    %905 = vmatpush1.msra.mxu0 0.0
    %906 = vmatprep.subr.mxu0 0.0
    %907 = vmatpush1.msra.mxu0 0.0
    %908 = vmatprep.subr.mxu0 0.0
    %909 = vmatpush1.msra.mxu0 0.0
    %910 = vmatprep.subr.mxu0 0.0
    %911 = vmatpush1.msra.mxu0 0.0
    %912 = vmatprep.subr.mxu0 0.0
    %913 = vmatpush1.msra.mxu0 0.0
    %914 = vmatprep.subr.mxu0 0.0
    %915 = vmatpush1.msra.mxu0 0.0
    %916 = vmatprep.subr.mxu0 0.0
    %917 = vmatpush1.msra.mxu0 0.0
    %918 = vmatprep.subr.mxu0 0.0
    %919 = vmatpush1.msra.mxu0 0.0
    %920 = vmatprep.subr.mxu0 0.0
    %921 = vmatpush1.msra.mxu0 0.0
    %922 = vmatprep.subr.mxu0 0.0
    %923 = vmatpush1.msra.mxu0 0.0
    %924 = vmatprep.subr.mxu0 0.0
    %925 = vmatpush1.msra.mxu0 0.0
    %926 = vmatprep.subr.mxu0 0.0
    %927 = vmatpush1.msra.mxu0 0.0
    %928 = vmatprep.subr.mxu0 0.0
    %929 = vmatpush1.msra.mxu0 0.0
    %930 = vmatprep.subr.mxu0 0.0
    %931 = vmatpush1.msra.mxu0 0.0
    %932 = vmatprep.mubr.f32.mxu0 0.0
    %933 = vmatmul.mubr.f32.gmra.mrb[0].mxu0 %v866
    %v934 = vpop.f32.mrb[0].mxu0
    %v935 = vadd.f32 0.0, %v934
    %v936 = vpop.f32.mrb[0].mxu0
    %937 = vdwg.mxu0
    %v938 = vadd.f32 %v286, %v935
    %v939 = vxor.u32 %v938, 2147483648
    %v940 = vmul.f32 %v939, 1.442695
    %v941 = vpow.pop %v940
    %v942 = vadd.f32 %v941, 1.0
    %v943 = vrcp.pop %v942
    %v944 = vmul.f32 1.0, %v943
    %v945 = vtanh.pop %v938
    %v946 = vmul.f32 %v944, %v856
    %948 = vrot.lane.b32.xlu0 %v945, 64
    %v949 = vpop.permute.xlu0 %948
    %v951 = vmul.f32 %v944, %v949
    %953 = vrot.lane.b32.xlu0 %v951, 32
    %v954 = vpop.permute.xlu0 %953
    %v956 = vadd.f32 %v946, %v954
    %v957 = vtanh.pop %v956
    %959 = vrot.lane.b32.xlu0 %v957, 64
    %v960 = vpop.permute.xlu0 %959
    %v962 = vmul.f32 %v944, %v960
    %964 = vrot.lane.b32.xlu0 %v962, 32
    %v965 = vpop.permute.xlu0 %964
    %v966 = vsel %vm664, %v965, 0
    %968 = vmatprep.subr.mxu0 0.0
    %969 = vmatpush1.msra.mxu0 %v51
    %970 = vmatprep.subr.mxu0 0.0
    %971 = vmatpush1.msra.mxu0 %v52
    %972 = vmatprep.subr.mxu0 0.0
    %973 = vmatpush1.msra.mxu0 %v53
    %974 = vmatprep.subr.mxu0 0.0
    %975 = vmatpush1.msra.mxu0 %v54
    %976 = vmatprep.subr.mxu0 0.0
    %977 = vmatpush1.msra.mxu0 0.0
    %978 = vmatprep.subr.mxu0 0.0
    %979 = vmatpush1.msra.mxu0 0.0
    %980 = vmatprep.subr.mxu0 0.0
    %981 = vmatpush1.msra.mxu0 0.0
    %982 = vmatprep.subr.mxu0 0.0
    %983 = vmatpush1.msra.mxu0 0.0
    %984 = vmatprep.subr.mxu0 0.0
    %985 = vmatpush1.msra.mxu0 0.0
    %986 = vmatprep.subr.mxu0 0.0
    %987 = vmatpush1.msra.mxu0 0.0
    %988 = vmatprep.subr.mxu0 0.0
    %989 = vmatpush1.msra.mxu0 0.0
    %990 = vmatprep.subr.mxu0 0.0
    %991 = vmatpush1.msra.mxu0 0.0
    %992 = vmatprep.subr.mxu0 0.0
    %993 = vmatpush1.msra.mxu0 0.0
    %994 = vmatprep.subr.mxu0 0.0
    %995 = vmatpush1.msra.mxu0 0.0
    %996 = vmatprep.subr.mxu0 0.0
    %997 = vmatpush1.msra.mxu0 0.0
    %998 = vmatprep.subr.mxu0 0.0
    %999 = vmatpush1.msra.mxu0 0.0
    %1000 = vmatprep.subr.mxu0 0.0
    %1001 = vmatpush1.msra.mxu0 0.0
    %1002 = vmatprep.subr.mxu0 0.0
    %1003 = vmatpush1.msra.mxu0 0.0
    %1004 = vmatprep.subr.mxu0 0.0
    %1005 = vmatpush1.msra.mxu0 0.0
    %1006 = vmatprep.subr.mxu0 0.0
    %1007 = vmatpush1.msra.mxu0 0.0
    %1008 = vmatprep.subr.mxu0 0.0
    %1009 = vmatpush1.msra.mxu0 0.0
    %1010 = vmatprep.subr.mxu0 0.0
    %1011 = vmatpush1.msra.mxu0 0.0
    %1012 = vmatprep.subr.mxu0 0.0
    %1013 = vmatpush1.msra.mxu0 0.0
    %1014 = vmatprep.subr.mxu0 0.0
    %1015 = vmatpush1.msra.mxu0 0.0
    %1016 = vmatprep.subr.mxu0 0.0
    %1017 = vmatpush1.msra.mxu0 0.0
    %1018 = vmatprep.subr.mxu0 0.0
    %1019 = vmatpush1.msra.mxu0 0.0
    %1020 = vmatprep.subr.mxu0 0.0
    %1021 = vmatpush1.msra.mxu0 0.0
    %1022 = vmatprep.subr.mxu0 0.0
    %1023 = vmatpush1.msra.mxu0 0.0
    %1024 = vmatprep.subr.mxu0 0.0
    %1025 = vmatpush1.msra.mxu0 0.0
    %1026 = vmatprep.subr.mxu0 0.0
    %1027 = vmatpush1.msra.mxu0 0.0
    %1028 = vmatprep.subr.mxu0 0.0
    %1029 = vmatpush1.msra.mxu0 0.0
    %1030 = vmatprep.subr.mxu0 0.0
    %1031 = vmatpush1.msra.mxu0 0.0
    %1032 = vmatprep.mubr.f32.mxu0 0.0
    %1033 = vmatmul.mubr.f32.gmra.mrb[0].mxu0 %v966
    %v1034 = vpop.f32.mrb[0].mxu0
    %v1035 = vadd.f32 0.0, %v1034
    %v1036 = vpop.f32.mrb[0].mxu0
    %1037 = vdwg.mxu0
    %v1038 = vadd.f32 %v361, %v1035
    %v1039 = vxor.u32 %v1038, 2147483648
    %v1040 = vmul.f32 %v1039, 1.442695
    %v1041 = vpow.pop %v1040
    %v1042 = vadd.f32 %v1041, 1.0
    %v1043 = vrcp.pop %v1042
    %v1044 = vmul.f32 1.0, %v1043
    %v1045 = vtanh.pop %v1038
    %v1046 = vmul.f32 %v1044, %v956
    %1048 = vrot.lane.b32.xlu0 %v1045, 64
    %v1049 = vpop.permute.xlu0 %1048
    %v1051 = vmul.f32 %v1044, %v1049
    %1053 = vrot.lane.b32.xlu0 %v1051, 32
    %v1054 = vpop.permute.xlu0 %1053
    %v1056 = vadd.f32 %v1046, %v1054
    %v1057 = vtanh.pop %v1056
    %1059 = vrot.lane.b32.xlu0 %v1057, 64
    %v1060 = vpop.permute.xlu0 %1059
    %v1062 = vmul.f32 %v1044, %v1060
    %1064 = vrot.lane.b32.xlu0 %v1062, 32
    %v1065 = vpop.permute.xlu0 %1064
    %v1066 = vsel %vm664, %v1065, 0
    %1068 = vmatprep.subr.mxu0 0.0
    %1069 = vmatpush1.msra.mxu0 %v51
    %1070 = vmatprep.subr.mxu0 0.0
    %1071 = vmatpush1.msra.mxu0 %v52
    %1072 = vmatprep.subr.mxu0 0.0
    %1073 = vmatpush1.msra.mxu0 %v53
    %1074 = vmatprep.subr.mxu0 0.0
    %1075 = vmatpush1.msra.mxu0 %v54
    %1076 = vmatprep.subr.mxu0 0.0
    %1077 = vmatpush1.msra.mxu0 0.0
    %1078 = vmatprep.subr.mxu0 0.0
    %1079 = vmatpush1.msra.mxu0 0.0
    %1080 = vmatprep.subr.mxu0 0.0
    %1081 = vmatpush1.msra.mxu0 0.0
    %1082 = vmatprep.subr.mxu0 0.0
    %1083 = vmatpush1.msra.mxu0 0.0
    %1084 = vmatprep.subr.mxu0 0.0
    %1085 = vmatpush1.msra.mxu0 0.0
    %1086 = vmatprep.subr.mxu0 0.0
    %1087 = vmatpush1.msra.mxu0 0.0
    %1088 = vmatprep.subr.mxu0 0.0
    %1089 = vmatpush1.msra.mxu0 0.0
    %1090 = vmatprep.subr.mxu0 0.0
    %1091 = vmatpush1.msra.mxu0 0.0
    %1092 = vmatprep.subr.mxu0 0.0
    %1093 = vmatpush1.msra.mxu0 0.0
    %1094 = vmatprep.subr.mxu0 0.0
    %1095 = vmatpush1.msra.mxu0 0.0
    %1096 = vmatprep.subr.mxu0 0.0
    %1097 = vmatpush1.msra.mxu0 0.0
    %1098 = vmatprep.subr.mxu0 0.0
    %1099 = vmatpush1.msra.mxu0 0.0
    %1100 = vmatprep.subr.mxu0 0.0
    %1101 = vmatpush1.msra.mxu0 0.0
    %1102 = vmatprep.subr.mxu0 0.0
    %1103 = vmatpush1.msra.mxu0 0.0
    %1104 = vmatprep.subr.mxu0 0.0
    %1105 = vmatpush1.msra.mxu0 0.0
    %1106 = vmatprep.subr.mxu0 0.0
    %1107 = vmatpush1.msra.mxu0 0.0
    %1108 = vmatprep.subr.mxu0 0.0
    %1109 = vmatpush1.msra.mxu0 0.0
    %1110 = vmatprep.subr.mxu0 0.0
    %1111 = vmatpush1.msra.mxu0 0.0
    %1112 = vmatprep.subr.mxu0 0.0
    %1113 = vmatpush1.msra.mxu0 0.0
    %1114 = vmatprep.subr.mxu0 0.0
    %1115 = vmatpush1.msra.mxu0 0.0
    %1116 = vmatprep.subr.mxu0 0.0
    %1117 = vmatpush1.msra.mxu0 0.0
    %1118 = vmatprep.subr.mxu0 0.0
    %1119 = vmatpush1.msra.mxu0 0.0
    %1120 = vmatprep.subr.mxu0 0.0
    %1121 = vmatpush1.msra.mxu0 0.0
    %1122 = vmatprep.subr.mxu0 0.0
    %1123 = vmatpush1.msra.mxu0 0.0
    %1124 = vmatprep.subr.mxu0 0.0
    %1125 = vmatpush1.msra.mxu0 0.0
    %1126 = vmatprep.subr.mxu0 0.0
    %1127 = vmatpush1.msra.mxu0 0.0
    %1128 = vmatprep.subr.mxu0 0.0
    %1129 = vmatpush1.msra.mxu0 0.0
    %1130 = vmatprep.subr.mxu0 0.0
    %1131 = vmatpush1.msra.mxu0 0.0
    %1132 = vmatprep.mubr.f32.mxu0 0.0
    %1133 = vmatmul.mubr.f32.gmra.mrb[0].mxu0 %v1066
    %v1134 = vpop.f32.mrb[0].mxu0
    %v1135 = vadd.f32 0.0, %v1134
    %v1136 = vpop.f32.mrb[0].mxu0
    %1137 = vdwg.mxu0
    %v1138 = vadd.f32 %v436, %v1135
    %v1139 = vxor.u32 %v1138, 2147483648
    %v1140 = vmul.f32 %v1139, 1.442695
    %v1141 = vpow.pop %v1140
    %v1142 = vadd.f32 %v1141, 1.0
    %v1143 = vrcp.pop %v1142
    %v1144 = vmul.f32 1.0, %v1143
    %v1145 = vtanh.pop %v1138
    %v1146 = vmul.f32 %v1144, %v1056
    %1148 = vrot.lane.b32.xlu0 %v1145, 64
    %v1149 = vpop.permute.xlu0 %1148
    %v1151 = vmul.f32 %v1144, %v1149
    %1153 = vrot.lane.b32.xlu0 %v1151, 32
    %v1154 = vpop.permute.xlu0 %1153
    %v1156 = vadd.f32 %v1146, %v1154
    %v1157 = vtanh.pop %v1156
    %1159 = vrot.lane.b32.xlu0 %v1157, 64
    %v1160 = vpop.permute.xlu0 %1159
    %v1162 = vmul.f32 %v1144, %v1160
    %1164 = vrot.lane.b32.xlu0 %v1162, 32
    %v1165 = vpop.permute.xlu0 %1164
    %v1166 = vsel %vm664, %v1165, 0
    %1168 = vmatprep.subr.mxu0 0.0
    %1169 = vmatpush1.msra.mxu0 %v51
    %1170 = vmatprep.subr.mxu0 0.0
    %1171 = vmatpush1.msra.mxu0 %v52
    %1172 = vmatprep.subr.mxu0 0.0
    %1173 = vmatpush1.msra.mxu0 %v53
    %1174 = vmatprep.subr.mxu0 0.0
    %1175 = vmatpush1.msra.mxu0 %v54
    %1176 = vmatprep.subr.mxu0 0.0
    %1177 = vmatpush1.msra.mxu0 0.0
    %1178 = vmatprep.subr.mxu0 0.0
    %1179 = vmatpush1.msra.mxu0 0.0
    %1180 = vmatprep.subr.mxu0 0.0
    %1181 = vmatpush1.msra.mxu0 0.0
    %1182 = vmatprep.subr.mxu0 0.0
    %1183 = vmatpush1.msra.mxu0 0.0
    %1184 = vmatprep.subr.mxu0 0.0
    %1185 = vmatpush1.msra.mxu0 0.0
    %1186 = vmatprep.subr.mxu0 0.0
    %1187 = vmatpush1.msra.mxu0 0.0
    %1188 = vmatprep.subr.mxu0 0.0
    %1189 = vmatpush1.msra.mxu0 0.0
    %1190 = vmatprep.subr.mxu0 0.0
    %1191 = vmatpush1.msra.mxu0 0.0
    %1192 = vmatprep.subr.mxu0 0.0
    %1193 = vmatpush1.msra.mxu0 0.0
    %1194 = vmatprep.subr.mxu0 0.0
    %1195 = vmatpush1.msra.mxu0 0.0
    %1196 = vmatprep.subr.mxu0 0.0
    %1197 = vmatpush1.msra.mxu0 0.0
    %1198 = vmatprep.subr.mxu0 0.0
    %1199 = vmatpush1.msra.mxu0 0.0
    %1200 = vmatprep.subr.mxu0 0.0
    %1201 = vmatpush1.msra.mxu0 0.0
    %1202 = vmatprep.subr.mxu0 0.0
    %1203 = vmatpush1.msra.mxu0 0.0
    %1204 = vmatprep.subr.mxu0 0.0
    %1205 = vmatpush1.msra.mxu0 0.0
    %1206 = vmatprep.subr.mxu0 0.0
    %1207 = vmatpush1.msra.mxu0 0.0
    %1208 = vmatprep.subr.mxu0 0.0
    %1209 = vmatpush1.msra.mxu0 0.0
    %1210 = vmatprep.subr.mxu0 0.0
    %1211 = vmatpush1.msra.mxu0 0.0
    %1212 = vmatprep.subr.mxu0 0.0
    %1213 = vmatpush1.msra.mxu0 0.0
    %1214 = vmatprep.subr.mxu0 0.0
    %1215 = vmatpush1.msra.mxu0 0.0
    %1216 = vmatprep.subr.mxu0 0.0
    %1217 = vmatpush1.msra.mxu0 0.0
    %1218 = vmatprep.subr.mxu0 0.0
    %1219 = vmatpush1.msra.mxu0 0.0
    %1220 = vmatprep.subr.mxu0 0.0
    %1221 = vmatpush1.msra.mxu0 0.0
    %1222 = vmatprep.subr.mxu0 0.0
    %1223 = vmatpush1.msra.mxu0 0.0
    %1224 = vmatprep.subr.mxu0 0.0
    %1225 = vmatpush1.msra.mxu0 0.0
    %1226 = vmatprep.subr.mxu0 0.0
    %1227 = vmatpush1.msra.mxu0 0.0
    %1228 = vmatprep.subr.mxu0 0.0
    %1229 = vmatpush1.msra.mxu0 0.0
    %1230 = vmatprep.subr.mxu0 0.0
    %1231 = vmatpush1.msra.mxu0 0.0
    %1232 = vmatprep.mubr.f32.mxu0 0.0
    %1233 = vmatmul.mubr.f32.gmra.mrb[0].mxu0 %v1166
    %v1234 = vpop.f32.mrb[0].mxu0
    %v1235 = vadd.f32 0.0, %v1234
    %v1236 = vpop.f32.mrb[0].mxu0
    %1237 = vdwg.mxu0
    %v1238 = vadd.f32 %v511, %v1235
    %v1239 = vxor.u32 %v1238, 2147483648
    %v1240 = vmul.f32 %v1239, 1.442695
    %v1241 = vpow.pop %v1240
    %v1242 = vadd.f32 %v1241, 1.0
    %v1243 = vrcp.pop %v1242
    %v1244 = vmul.f32 1.0, %v1243
    %v1245 = vtanh.pop %v1238
    %v1246 = vmul.f32 %v1244, %v1156
    %1248 = vrot.lane.b32.xlu0 %v1245, 64
    %v1249 = vpop.permute.xlu0 %1248
    %v1251 = vmul.f32 %v1244, %v1249
    %1253 = vrot.lane.b32.xlu0 %v1251, 32
    %v1254 = vpop.permute.xlu0 %1253
    %v1256 = vadd.f32 %v1246, %v1254
    %v1257 = vtanh.pop %v1256
    %1259 = vrot.lane.b32.xlu0 %v1257, 64
    %v1260 = vpop.permute.xlu0 %1259
    %v1262 = vmul.f32 %v1244, %v1260
    %1264 = vrot.lane.b32.xlu0 %v1262, 32
    %v1265 = vpop.permute.xlu0 %1264
    %v1266 = vsel %vm664, %v1265, 0
    %1268 = vmatprep.subr.mxu0 0.0
    %1269 = vmatpush1.msra.mxu0 %v51
    %1270 = vmatprep.subr.mxu0 0.0
    %1271 = vmatpush1.msra.mxu0 %v52
    %1272 = vmatprep.subr.mxu0 0.0
    %1273 = vmatpush1.msra.mxu0 %v53
    %1274 = vmatprep.subr.mxu0 0.0
    %1275 = vmatpush1.msra.mxu0 %v54
    %1276 = vmatprep.subr.mxu0 0.0
    %1277 = vmatpush1.msra.mxu0 0.0
    %1278 = vmatprep.subr.mxu0 0.0
    %1279 = vmatpush1.msra.mxu0 0.0
    %1280 = vmatprep.subr.mxu0 0.0
    %1281 = vmatpush1.msra.mxu0 0.0
    %1282 = vmatprep.subr.mxu0 0.0
    %1283 = vmatpush1.msra.mxu0 0.0
    %1284 = vmatprep.subr.mxu0 0.0
    %1285 = vmatpush1.msra.mxu0 0.0
    %1286 = vmatprep.subr.mxu0 0.0
    %1287 = vmatpush1.msra.mxu0 0.0
    %1288 = vmatprep.subr.mxu0 0.0
    %1289 = vmatpush1.msra.mxu0 0.0
    %1290 = vmatprep.subr.mxu0 0.0
    %1291 = vmatpush1.msra.mxu0 0.0
    %1292 = vmatprep.subr.mxu0 0.0
    %1293 = vmatpush1.msra.mxu0 0.0
    %1294 = vmatprep.subr.mxu0 0.0
    %1295 = vmatpush1.msra.mxu0 0.0
    %1296 = vmatprep.subr.mxu0 0.0
    %1297 = vmatpush1.msra.mxu0 0.0
    %1298 = vmatprep.subr.mxu0 0.0
    %1299 = vmatpush1.msra.mxu0 0.0
    %1300 = vmatprep.subr.mxu0 0.0
    %1301 = vmatpush1.msra.mxu0 0.0
    %1302 = vmatprep.subr.mxu0 0.0
    %1303 = vmatpush1.msra.mxu0 0.0
    %1304 = vmatprep.subr.mxu0 0.0
    %1305 = vmatpush1.msra.mxu0 0.0
    %1306 = vmatprep.subr.mxu0 0.0
    %1307 = vmatpush1.msra.mxu0 0.0
    %1308 = vmatprep.subr.mxu0 0.0
    %1309 = vmatpush1.msra.mxu0 0.0
    %1310 = vmatprep.subr.mxu0 0.0
    %1311 = vmatpush1.msra.mxu0 0.0
    %1312 = vmatprep.subr.mxu0 0.0
    %1313 = vmatpush1.msra.mxu0 0.0
    %1314 = vmatprep.subr.mxu0 0.0
    %1315 = vmatpush1.msra.mxu0 0.0
    %1316 = vmatprep.subr.mxu0 0.0
    %1317 = vmatpush1.msra.mxu0 0.0
    %1318 = vmatprep.subr.mxu0 0.0
    %1319 = vmatpush1.msra.mxu0 0.0
    %1320 = vmatprep.subr.mxu0 0.0
    %1321 = vmatpush1.msra.mxu0 0.0
    %1322 = vmatprep.subr.mxu0 0.0
    %1323 = vmatpush1.msra.mxu0 0.0
    %1324 = vmatprep.subr.mxu0 0.0
    %1325 = vmatpush1.msra.mxu0 0.0
    %1326 = vmatprep.subr.mxu0 0.0
    %1327 = vmatpush1.msra.mxu0 0.0
    %1328 = vmatprep.subr.mxu0 0.0
    %1329 = vmatpush1.msra.mxu0 0.0
    %1330 = vmatprep.subr.mxu0 0.0
    %1331 = vmatpush1.msra.mxu0 0.0
    %1332 = vmatprep.mubr.f32.mxu0 0.0
    %1333 = vmatmul.mubr.f32.gmra.mrb[0].mxu0 %v1266
    %v1334 = vpop.f32.mrb[0].mxu0
    %v1335 = vadd.f32 0.0, %v1334
    %v1336 = vpop.f32.mrb[0].mxu0
    %1337 = vdwg.mxu0
    %v1338 = vadd.f32 %v586, %v1335
    %v1339 = vxor.u32 %v1338, 2147483648
    %v1340 = vmul.f32 %v1339, 1.442695
    %v1341 = vpow.pop %v1340
    %v1342 = vadd.f32 %v1341, 1.0
    %v1343 = vrcp.pop %v1342
    %v1344 = vmul.f32 1.0, %v1343
    %v1345 = vtanh.pop %v1338
    %v1346 = vmul.f32 %v1344, %v1256
    %1348 = vrot.lane.b32.xlu0 %v1345, 64
    %v1349 = vpop.permute.xlu0 %1348
    %v1351 = vmul.f32 %v1344, %v1349
    %1353 = vrot.lane.b32.xlu0 %v1351, 32
    %v1354 = vpop.permute.xlu0 %1353
    %v1356 = vadd.f32 %v1346, %v1354
    %v1357 = vtanh.pop %v1356
    %1359 = vrot.lane.b32.xlu0 %v1357, 64
    %v1360 = vpop.permute.xlu0 %1359
    %v1362 = vmul.f32 %v1344, %v1360
    %1364 = vrot.lane.b32.xlu0 %v1362, 32
    %v1365 = vpop.permute.xlu0 %1364
    %v1366 = vsel %vm664, %v1365, 0
    %1368 = vmatprep.subr.mxu0 0.0
    %1369 = vmatpush1.msra.mxu0 %v51
    %1370 = vmatprep.subr.mxu0 0.0
    %1371 = vmatpush1.msra.mxu0 %v52
    %1372 = vmatprep.subr.mxu0 0.0
    %1373 = vmatpush1.msra.mxu0 %v53
    %1374 = vmatprep.subr.mxu0 0.0
    %1375 = vmatpush1.msra.mxu0 %v54
    %1376 = vmatprep.subr.mxu0 0.0
    %1377 = vmatpush1.msra.mxu0 0.0
    %1378 = vmatprep.subr.mxu0 0.0
    %1379 = vmatpush1.msra.mxu0 0.0
    %1380 = vmatprep.subr.mxu0 0.0
    %1381 = vmatpush1.msra.mxu0 0.0
    %1382 = vmatprep.subr.mxu0 0.0
    %1383 = vmatpush1.msra.mxu0 0.0
    %1384 = vmatprep.subr.mxu0 0.0
    %1385 = vmatpush1.msra.mxu0 0.0
    %1386 = vmatprep.subr.mxu0 0.0
    %1387 = vmatpush1.msra.mxu0 0.0
    %1388 = vmatprep.subr.mxu0 0.0
    %1389 = vmatpush1.msra.mxu0 0.0
    %1390 = vmatprep.subr.mxu0 0.0
    %1391 = vmatpush1.msra.mxu0 0.0
    %1392 = vmatprep.subr.mxu0 0.0
    %1393 = vmatpush1.msra.mxu0 0.0
    %1394 = vmatprep.subr.mxu0 0.0
    %1395 = vmatpush1.msra.mxu0 0.0
    %1396 = vmatprep.subr.mxu0 0.0
    %1397 = vmatpush1.msra.mxu0 0.0
    %1398 = vmatprep.subr.mxu0 0.0
    %1399 = vmatpush1.msra.mxu0 0.0
    %1400 = vmatprep.subr.mxu0 0.0
    %1401 = vmatpush1.msra.mxu0 0.0
    %1402 = vmatprep.subr.mxu0 0.0
    %1403 = vmatpush1.msra.mxu0 0.0
    %1404 = vmatprep.subr.mxu0 0.0
    %1405 = vmatpush1.msra.mxu0 0.0
    %1406 = vmatprep.subr.mxu0 0.0
    %1407 = vmatpush1.msra.mxu0 0.0
    %1408 = vmatprep.subr.mxu0 0.0
    %1409 = vmatpush1.msra.mxu0 0.0
    %1410 = vmatprep.subr.mxu0 0.0
    %1411 = vmatpush1.msra.mxu0 0.0
    %1412 = vmatprep.subr.mxu0 0.0
    %1413 = vmatpush1.msra.mxu0 0.0
    %1414 = vmatprep.subr.mxu0 0.0
    %1415 = vmatpush1.msra.mxu0 0.0
    %1416 = vmatprep.subr.mxu0 0.0
    %1417 = vmatpush1.msra.mxu0 0.0
    %1418 = vmatprep.subr.mxu0 0.0
    %1419 = vmatpush1.msra.mxu0 0.0
    %1420 = vmatprep.subr.mxu0 0.0
    %1421 = vmatpush1.msra.mxu0 0.0
    %1422 = vmatprep.subr.mxu0 0.0
    %1423 = vmatpush1.msra.mxu0 0.0
    %1424 = vmatprep.subr.mxu0 0.0
    %1425 = vmatpush1.msra.mxu0 0.0
    %1426 = vmatprep.subr.mxu0 0.0
    %1427 = vmatpush1.msra.mxu0 0.0
    %1428 = vmatprep.subr.mxu0 0.0
    %1429 = vmatpush1.msra.mxu0 0.0
    %1430 = vmatprep.subr.mxu0 0.0
    %1431 = vmatpush1.msra.mxu0 0.0
    %1432 = vmatprep.mubr.f32.mxu0 0.0
    %1433 = vmatmul.mubr.f32.gmra.mrb[0].mxu0 %v1366
    %v1434 = vpop.f32.mrb[0].mxu0
    %v1435 = vadd.f32 0.0, %v1434
    %v1436 = vpop.f32.mrb[0].mxu0
    %1437 = vdwg.mxu0
    %v1438 = vadd.f32 %v661, %v1435
    %v1439 = vxor.u32 %v1438, 2147483648
    %v1440 = vmul.f32 %v1439, 1.442695
    %v1441 = vpow.pop %v1440
    %v1442 = vadd.f32 %v1441, 1.0
    %v1443 = vrcp.pop %v1442
    %v1444 = vmul.f32 1.0, %v1443
    %v1445 = vtanh.pop %v1438
    %v1446 = vmul.f32 %v1444, %v1356
    %1448 = vrot.lane.b32.xlu0 %v1445, 64
    %v1449 = vpop.permute.xlu0 %1448
    %v1451 = vmul.f32 %v1444, %v1449
    %1453 = vrot.lane.b32.xlu0 %v1451, 32
    %v1454 = vpop.permute.xlu0 %1453
    %v1456 = vadd.f32 %v1446, %v1454
    %v1457 = vtanh.pop %v1456
    %1459 = vrot.lane.b32.xlu0 %v1457, 64
    %v1460 = vpop.permute.xlu0 %1459
    %v1462 = vmul.f32 %v1444, %v1460
    %v1463 = vld [vmem:[%s4] sm:$0xff]
    %v1464 = vld [vmem:[%s4 + $0x8] sm:$0xff]
    %v1465 = vld [vmem:[%s4 + $0x10] sm:$0xff]
    %v1466 = vld [vmem:[%s4 + $0x18] sm:$0xff]
    %v1467 = vld [vmem:[%s5] sm:$0x1]
    %v1469 = vlaneseq
    %v1470 = vshrl.u32 %v1469, 7
    %v1471 = vsub.s32 0, %v1470
    %v1472 = vrot.slane %v1467, %v1471
    %1475 = vrot.lane.b32.xlu0 %v1462, 32
    %v1476 = vpop.permute.xlu0 %1475
    %v1477 = vsel %vm664, %v1476, 0
    %1479 = vmatprep.subr.mxu0 0.0
    %1480 = vmatpush1.msra.mxu0 %v1463
    %1481 = vmatprep.subr.mxu0 0.0
    %1482 = vmatpush1.msra.mxu0 %v1464
    %1483 = vmatprep.subr.mxu0 0.0
    %1484 = vmatpush1.msra.mxu0 %v1465
    %1485 = vmatprep.subr.mxu0 0.0
    %1486 = vmatpush1.msra.mxu0 %v1466
    %1487 = vmatprep.subr.mxu0 0.0
    %1488 = vmatpush1.msra.mxu0 0.0
    %1489 = vmatprep.subr.mxu0 0.0
    %1490 = vmatpush1.msra.mxu0 0.0
    %1491 = vmatprep.subr.mxu0 0.0
    %1492 = vmatpush1.msra.mxu0 0.0
    %1493 = vmatprep.subr.mxu0 0.0
    %1494 = vmatpush1.msra.mxu0 0.0
    %1495 = vmatprep.subr.mxu0 0.0
    %1496 = vmatpush1.msra.mxu0 0.0
    %1497 = vmatprep.subr.mxu0 0.0
    %1498 = vmatpush1.msra.mxu0 0.0
    %1499 = vmatprep.subr.mxu0 0.0
    %1500 = vmatpush1.msra.mxu0 0.0
    %1501 = vmatprep.subr.mxu0 0.0
    %1502 = vmatpush1.msra.mxu0 0.0
    %1503 = vmatprep.subr.mxu0 0.0
    %1504 = vmatpush1.msra.mxu0 0.0
    %1505 = vmatprep.subr.mxu0 0.0
    %1506 = vmatpush1.msra.mxu0 0.0
    %1507 = vmatprep.subr.mxu0 0.0
    %1508 = vmatpush1.msra.mxu0 0.0
    %1509 = vmatprep.subr.mxu0 0.0
    %1510 = vmatpush1.msra.mxu0 0.0
    %1511 = vmatprep.subr.mxu0 0.0
    %1512 = vmatpush1.msra.mxu0 0.0
    %1513 = vmatprep.subr.mxu0 0.0
    %1514 = vmatpush1.msra.mxu0 0.0
    %1515 = vmatprep.subr.mxu0 0.0
    %1516 = vmatpush1.msra.mxu0 0.0
    %1517 = vmatprep.subr.mxu0 0.0
    %1518 = vmatpush1.msra.mxu0 0.0
    %1519 = vmatprep.subr.mxu0 0.0
    %1520 = vmatpush1.msra.mxu0 0.0
    %1521 = vmatprep.subr.mxu0 0.0
    %1522 = vmatpush1.msra.mxu0 0.0
    %1523 = vmatprep.subr.mxu0 0.0
    %1524 = vmatpush1.msra.mxu0 0.0
    %1525 = vmatprep.subr.mxu0 0.0
    %1526 = vmatpush1.msra.mxu0 0.0
    %1527 = vmatprep.subr.mxu0 0.0
    %1528 = vmatpush1.msra.mxu0 0.0
    %1529 = vmatprep.subr.mxu0 0.0
    %1530 = vmatpush1.msra.mxu0 0.0
    %1531 = vmatprep.subr.mxu0 0.0
    %1532 = vmatpush1.msra.mxu0 0.0
    %1533 = vmatprep.subr.mxu0 0.0
    %1534 = vmatpush1.msra.mxu0 0.0
    %1535 = vmatprep.subr.mxu0 0.0
    %1536 = vmatpush1.msra.mxu0 0.0
    %1537 = vmatprep.subr.mxu0 0.0
    %1538 = vmatpush1.msra.mxu0 0.0
    %1539 = vmatprep.subr.mxu0 0.0
    %1540 = vmatpush1.msra.mxu0 0.0
    %1541 = vmatprep.subr.mxu0 0.0
    %1542 = vmatpush1.msra.mxu0 0.0
    %1543 = vmatprep.mubr.f32.mxu0 0.0
    %1544 = vmatmul.mubr.f32.gmra.mrb[0].mxu0 %v1477
    %v1545 = vpop.f32.mrb[0].mxu0
    %v1546 = vadd.f32 %v1472, %v1545
    %v1547 = vpop.f32.mrb[0].mxu0
    %1548 = vdwg.mxu0
    %v1549 = vxor.u32 %v1546, 2147483648
    %v1550 = vmul.f32 %v1549, 1.442695
    %v1551 = vpow.pop %v1550
    %v1552 = vadd.f32 %v1551, 1.0
    %v1553 = vrcp.pop %v1552
    %v1554 = vmul.f32 1.0, %v1553
    %vm1555 = vcmask 31744
    %1556 = vst.msk [vmem:[%s6] sm:$0xff] %vm1555, %v1554
    // Predicated region
    $region34: #{tpu_custom_call.1} parent=1 // pred_check
      _
    $region35: #{tpu_custom_call.1} parent=1 // pred_check_branch
      %1558 = sbr.rel (0) target = $region37
    $region36: #{tpu_custom_call.1} parent=1 // pred_region
      _
    $region37: #{tpu_custom_call.1} parent=1 // pred_fallthru
      _
    // Predicated region
    $region38: #{tpu_custom_call.1} parent=1 // pred_check
      _
    $region39: #{tpu_custom_call.1} parent=1 // pred_check_branch
      %1560 = sbr.rel (0) target = $region41
    $region40: #{tpu_custom_call.1} parent=1 // pred_region
      _
    $region41: #{tpu_custom_call.1} parent=1 // pred_fallthru
      _
    %1561 = vsyncpa [#allocation3], 1
    %1562 = vsyncpa [#allocation5], 1

</llo_original>
